<compile_context>
chip_gen: v5e
topology: v5e:2x2
jax: 0.10.0
libtpu: 0.0.40
codegen_flags: <defaults>
</compile_context>

<pallas_src>
import functools

import numpy as np
import jax
import jax.numpy as jnp
from jax.experimental import pallas as pl
from jax.experimental.pallas import tpu as pltpu

F32 = jnp.float32
BF16 = jnp.bfloat16


def round_up(x, m):
    return (x + m - 1) // m * m


def cdiv(a, b):
    return (a + b - 1) // b


# ----------------------------------------------------------------------------
# Pallas matmul kernel: bf16 x bf16 -> f32 accumulator, fused bias/ReLU/scale
# ----------------------------------------------------------------------------
def _matmul_kernel(x_ref, w_ref, b_ref, o_ref, acc_ref, *, relu, out_scale):
    @pl.when(pl.program_id(2) == 0)
    def _():
        acc_ref[...] = jnp.zeros_like(acc_ref)

    acc_ref[...] += jnp.dot(x_ref[...], w_ref[...],
                            preferred_element_type=jnp.float32)

    @pl.when(pl.program_id(2) == pl.num_programs(2) - 1)
    def _():
        y = acc_ref[...] + b_ref[...]
        if relu:
            y = jnp.maximum(y, 0.0)
        if out_scale is not None:
            y = y * out_scale
        o_ref[...] = y.astype(o_ref.dtype)


def _pick_k_tile(K, max_tk=2048):
    """Return (tk, Kp). Prefer tk == K (no pad) or a 128-multiple divisor."""
    if K <= max_tk:
        return K, K
    best = None
    for t in range(128, max_tk + 1, 128):
        if K % t == 0:
            best = t
    if best is not None:
        return best, K
    return max_tk, round_up(K, max_tk)      # rare fallback: zero-pad K


def _pick_n_tile(N, max_tn=512):
    if N <= max_tn:
        return N
    best = None
    for t in range(128, max_tn + 1, 128):
        if N % t == 0:
            best = t
    return best if best is not None else max_tn


def prep_linear(wm, b):
    """One-time weight prep: (K,N) matrix -> bf16, bias -> (1,N) f32, tiles."""
    K, N = wm.shape
    tk, Kp = _pick_k_tile(K)
    tn = _pick_n_tile(N)
    w = jnp.asarray(wm, F32)
    if Kp != K:
        w = jnp.pad(w, ((0, Kp - K), (0, 0)))
    return {
        "w": w.astype(BF16),
        "b": jnp.asarray(b, F32).reshape(1, N),
        "K": K, "Kp": Kp, "N": N, "tk": tk, "tn": tn,
    }


def matmul_bias_act(x, prep, relu=False, out_scale=None):
    """x:(M,K) @ prep['w']:(Kp,N) + bias, optional ReLU and output scale."""
    M, K = x.shape
    assert K == prep["K"]
    Kp, N, tk, tn = prep["Kp"], prep["N"], prep["tk"], prep["tn"]

    xb = x.astype(BF16)
    if Kp != K:
        xb = jnp.pad(xb, ((0, 0), (0, Kp - K)))

    if M >= 4096:
        tm, Mp = 512, M                    # big conv GEMMs: few, fat M tiles
    elif M >= 128:
        tm, Mp = 128, M
    else:
        tm = round_up(max(M, 1), 8)        # GEMV-style fc layers
        Mp = tm
        if Mp != M:
            xb = jnp.pad(xb, ((0, Mp - M), (0, 0)))

    grid = (cdiv(Mp, tm), cdiv(N, tn), Kp // tk)

    # Double-buffered working set (bf16 inputs, f32 bias/acc/out) + margin.
    vmem = 2 * (tm * tk * 2 + tk * tn * 2 + tn * 4) + 3 * tm * tn * 4
    vmem = min(int(vmem * 1.5) + (2 << 20), 48 << 20)   # v7x-safe (<64MiB/TC)

    out = pl.pallas_call(
        functools.partial(_matmul_kernel, relu=relu, out_scale=out_scale),
        out_shape=jax.ShapeDtypeStruct((Mp, N), F32),
        grid_spec=pltpu.PrefetchScalarGridSpec(
            num_scalar_prefetch=0,
            grid=grid,
            in_specs=[
                pl.BlockSpec((tm, tk), lambda i, j, k: (i, k)),
                pl.BlockSpec((tk, tn), lambda i, j, k: (k, j)),
                pl.BlockSpec((1, tn), lambda i, j, k: (0, j)),
            ],
            out_specs=pl.BlockSpec((tm, tn), lambda i, j, k: (i, j)),
            scratch_shapes=[pltpu.VMEM((tm, tn), jnp.float32)],
        ),
        compiler_params=pltpu.CompilerParams(
            dimension_semantics=("parallel", "parallel", "arbitrary"),
            vmem_limit_bytes=vmem,
        ),
    )(xb, prep["w"], prep["b"])

    if Mp != M:
        out = out[:M]
    return out


# ----------------------------------------------------------------------------
# Pallas maxpool 2x2 stride 2 (ceil_mode), tiled over output rows
# ----------------------------------------------------------------------------
def _maxpool_kernel(x_ref, o_ref):
    # x_ref block: (1, 2, 2, row_tile, Wo, C) -- window elems on leading axes.
    a = jnp.maximum(x_ref[0, 0, 0], x_ref[0, 0, 1])
    b = jnp.maximum(x_ref[0, 1, 0], x_ref[0, 1, 1])
    o_ref[0] = jnp.maximum(a, b)


def maxpool2x2_ceil(x, row_tile=8):
    """MaxPool2d(kernel=2, stride=2, ceil_mode=True) on NHWC via Pallas."""
    N, H, W, C = x.shape
    Ho, Wo = cdiv(H, 2), cdiv(W, 2)
    Ho_p = round_up(Ho, row_tile)
    Hp, Wp = 2 * Ho_p, 2 * Wo
    if (Hp, Wp) != (H, W):
        x = jnp.pad(x, ((0, 0), (0, Hp - H), (0, Wp - W), (0, 0)),
                    constant_values=-jnp.inf)
    # Glue: expose the 2x2 window on leading axes -> kernel is pure jnp.maximum.
    xr = x.reshape(N, Ho_p, 2, Wo, 2, C).transpose(0, 2, 4, 1, 3, 5)
    out = pl.pallas_call(
        _maxpool_kernel,
        out_shape=jax.ShapeDtypeStruct((N, Ho_p, Wo, C), F32),
        grid=(N, Ho_p // row_tile),
        in_specs=[pl.BlockSpec((1, 2, 2, row_tile, Wo, C),
                               lambda n, r: (n, 0, 0, r, 0, 0))],
        out_specs=pl.BlockSpec((1, row_tile, Wo, C),
                               lambda n, r: (n, r, 0, 0)),
        compiler_params=pltpu.CompilerParams(
            dimension_semantics=("parallel", "parallel")),
    )(xr)
    return out[:, :Ho]


# ----------------------------------------------------------------------------
# Conv / ConvTranspose built on the Pallas matmul
# ----------------------------------------------------------------------------
def prep_conv(w, b):
    """w: (Cout, Cin, KH, KW) PyTorch layout; prep once at init."""
    Cout, Cin, KH, KW = w.shape
    wm = jnp.transpose(w, (2, 3, 1, 0)).reshape(KH * KW * Cin, Cout)
    d = prep_linear(wm, b)
    d.update(KH=KH, KW=KW, Cin=Cin, Cout=Cout)
    return d


def conv2d(x, prep, padding=0, relu=False, out_scale=None):
    """x: NHWC f32; weights pre-transposed/pre-cast (bf16) at init."""
    N, H, W, Cin = x.shape
    KH, KW, Cout = prep["KH"], prep["KW"], prep["Cout"]
    if padding:
        x = jnp.pad(x, ((0, 0), (padding, padding), (padding, padding), (0, 0)))
    Hp, Wp = x.shape[1], x.shape[2]
    OH, OW = Hp - KH + 1, Wp - KW + 1
    xb = x.astype(BF16)
    if KH == 1 and KW == 1:
        patches = xb.reshape(N * OH * OW, Cin)     # 1x1 conv: no expansion
    else:
        # TODO(synk): fold the KHxKW taps into the matmul K grid axis (shifted
        # window index_map) so the im2col patches never hit HBM; kept as bf16
        # im2col here for lowering robustness.
        cols = [xb[:, i:i + OH, j:j + OW, :] for i in range(KH) for j in range(KW)]
        patches = jnp.concatenate(cols, axis=-1).reshape(N * OH * OW, KH * KW * Cin)
    out = matmul_bias_act(patches, prep, relu=relu, out_scale=out_scale)
    return out.reshape(N, OH, OW, Cout)


def prep_deconv(w, stride):
    """ConvTranspose2d weight (Cin, Cout, KH, KW) with KH == KW == 2*stride.

    Exact stride^2 phase (sub-pixel) decomposition: one dense matmul of the
    2x2-tap patches of the (zero-padded-by-1) input against a stacked
    per-phase weight matrix; no dilated intermediate, no zero MACs.
    """
    Cin, Cout, KH, KW = w.shape
    s = stride
    assert KH == 2 * s and KW == 2 * s
    w6 = jnp.asarray(w, F32).reshape(Cin, Cout, 2, s, 2, s)   # (ci,co,mh,rh,mw,rw)
    w6 = jnp.flip(w6, axis=(2, 4))                            # m -> t = 1 - m
    w6 = jnp.transpose(w6, (2, 4, 0, 3, 5, 1))                # (th,tw,ci,rh,rw,co)
    wm = w6.reshape(4 * Cin, s * s * Cout)
    d = prep_linear(wm, jnp.zeros((s * s * Cout,), F32))
    d.update(stride=s, Cin=Cin, Cout=Cout)
    return d


def conv_transpose2d(x, dprep):
    """x: NHWC; exact ConvTranspose2d(stride=s, kernel=2s, bias=False)."""
    s, Cout = dprep["stride"], dprep["Cout"]
    N, H, W, Cin = x.shape
    xb = jnp.pad(x.astype(BF16), ((0, 0), (1, 1), (1, 1), (0, 0)))
    Qh, Qw = H + 1, W + 1
    cols = [xb[:, i:i + Qh, j:j + Qw, :] for i in range(2) for j in range(2)]
    patches = jnp.concatenate(cols, axis=-1).reshape(N * Qh * Qw, 4 * Cin)
    out = matmul_bias_act(patches, dprep, relu=False)          # (NQhQw, s*s*Cout)
    out = out.reshape(N, Qh, Qw, s, s, Cout)
    out = out.transpose(0, 1, 3, 2, 4, 5).reshape(N, Qh * s, Qw * s, Cout)
    return out                                                 # (H-1)*s + 2s


# ----------------------------------------------------------------------------
# Parameters (deterministic, synthetic) -- all weight prep hoisted here
# ----------------------------------------------------------------------------
def get_upsampling_weight(in_channels, out_channels, kernel_size):
    factor = (kernel_size + 1) // 2
    if kernel_size % 2 == 1:
        center = factor - 1
    else:
        center = factor - 0.5
    og = np.ogrid[:kernel_size, :kernel_size]
    filt = (1 - abs(og[0] - center) / factor) * (1 - abs(og[1] - center) / factor)
    weight = np.zeros((in_channels, out_channels, kernel_size, kernel_size),
                      dtype=np.float32)
    weight[range(in_channels), range(out_channels), :, :] = filt
    return jnp.asarray(weight)


def init_params(key, n_class=7):
    # VGG16 feature conv shapes (Cin, Cout) per conv layer, 3x3 kernels.
    cfg = [(3, 64), (64, 64),
           (64, 128), (128, 128),
           (128, 256), (256, 256), (256, 256),
           (256, 512), (512, 512), (512, 512),
           (512, 512), (512, 512), (512, 512)]
    keys = jax.random.split(key, len(cfg) + 5)
    feats = []
    for i, (cin, cout) in enumerate(cfg):
        std = (2.0 / (cin * 9)) ** 0.5
        w = std * jax.random.normal(keys[i], (cout, cin, 3, 3), F32)
        feats.append(prep_conv(w, jnp.zeros((cout,), F32)))
    k = len(cfg)
    fc6_w = (2.0 / (512 * 49)) ** 0.5 * jax.random.normal(keys[k], (4096, 512, 7, 7), F32)
    fc7_w = (2.0 / 4096) ** 0.5 * jax.random.normal(keys[k + 1], (4096, 4096, 1, 1), F32)
    p1_w = (2.0 / 4096) ** 0.5 * jax.random.normal(keys[k + 2], (n_class, 4096, 1, 1), F32)
    p2_w = (2.0 / 512) ** 0.5 * jax.random.normal(keys[k + 3], (n_class, 512, 1, 1), F32)
    p3_w = (2.0 / 256) ** 0.5 * jax.random.normal(keys[k + 4], (n_class, 256, 1, 1), F32)

    P = {
        "features": feats,
        "fc6": prep_conv(fc6_w, jnp.zeros((4096,), F32)),
        "fc7": prep_conv(fc7_w, jnp.zeros((4096,), F32)),
        "p1": prep_conv(p1_w, jnp.zeros((n_class,), F32)),
        "p2": prep_conv(p2_w, jnp.zeros((n_class,), F32)),
        "p3": prep_conv(p3_w, jnp.zeros((n_class,), F32)),
        # ConvTranspose weights: fixed bilinear upsampling (as _initialize_weights)
        "deconv1": prep_deconv(get_upsampling_weight(n_class, n_class, 4), 2),
        "deconv2": prep_deconv(get_upsampling_weight(n_class, n_class, 4), 2),
        "deconv3": prep_deconv(get_upsampling_weight(n_class, n_class, 16), 8),
    }
    return P


# ----------------------------------------------------------------------------
# Forward pass (matches segmentation_model.forward)
# ----------------------------------------------------------------------------
def forward(P, x_nchw):
    in_h, in_w = x_nchw.shape[2], x_nchw.shape[3]
    x = jnp.transpose(x_nchw, (0, 2, 3, 1)).astype(F32)   # NCHW -> NHWC

    feats = P["features"]
    block_sizes = [2, 2, 3, 3, 3]
    ci = 0
    pool3 = pool4 = None
    for bi, nconv in enumerate(block_sizes):
        for _ in range(nconv):
            pad = 50 if ci == 0 else 1          # features[0].padding = (50, 50)
            x = conv2d(x, feats[ci], padding=pad, relu=True)
            ci += 1
        x = maxpool2x2_ceil(x)                  # ceil_mode=True
        if bi == 2:
            pool3 = x                            # after features[16]
        elif bi == 3:
            pool4 = x                            # after features[23]

    # fc6 / fc7 (ReLU fused into the Pallas matmul epilogue)
    # TODO(synk): Dropout2d is stochastic in PyTorch training mode; treated as
    # identity (inference semantics) here.
    x = conv2d(x, P["fc6"], relu=True)
    x = conv2d(x, P["fc7"], relu=True)

    x = conv2d(x, P["p1"])
    x = conv_transpose2d(x, P["deconv1"])
    deconv1 = x

    # 1x1 conv commutes with spatial crop -> crop first; skip scale fused into
    # the matmul epilogue; the residual add is a trivial fusable jnp add.
    dh, dw = deconv1.shape[1], deconv1.shape[2]
    p2 = conv2d(pool4[:, 5:5 + dh, 5:5 + dw, :], P["p2"], out_scale=0.01)
    x = deconv1 + p2                             # deconv1 + predict2 * 0.01

    x = conv_transpose2d(x, P["deconv2"])
    deconv2 = x

    dh, dw = deconv2.shape[1], deconv2.shape[2]
    p3 = conv2d(pool3[:, 9:9 + dh, 9:9 + dw, :], P["p3"], out_scale=0.0001)
    x = p3 + deconv2                             # predict3 * 0.0001 + deconv2

    x = conv_transpose2d(x, P["deconv3"])
    x = x[:, 31:31 + in_h, 31:31 + in_w, :]      # clamps like PyTorch slicing
    return jnp.transpose(x, (0, 3, 1, 2))        # back to NCHW


# ----------------------------------------------------------------------------
if __name__ == "__main__":
    key = jax.random.PRNGKey(0)
    pkey, xkey = jax.random.split(key)
    params = init_params(pkey, n_class=7)

    # Small input consistent with the module: 3-channel image, spatial 96
    # (smallest even size that survives fc6's 7x7 conv after 5 poolings).
    x = jax.random.uniform(xkey, (1, 3, 96, 96), F32)

    out = forward(params, x)
    out = jax.block_until_ready(out)

    assert out.ndim == 4 and out.shape[0] == 1 and out.shape[1] == 7
    assert bool(jnp.all(jnp.isfinite(out)))
    print("KERNEL_OK")
</pallas_src>

<mosaic_0001>
module attributes {stable_mosaic.version = 11 : i64} {
  func.func @_matmul_kernel(%arg0: i32, %arg1: i32, %arg2: i32, %arg3: memref<512x27xbf16, #tpu.memory_space<vmem>>, %arg4: memref<27x64xbf16, #tpu.memory_space<vmem>>, %arg5: memref<1x64xf32, #tpu.memory_space<vmem>>, %arg6: memref<512x64xf32, #tpu.memory_space<vmem>>, %arg7: memref<512x64xf32, #tpu.memory_space<vmem>>) attributes {dimension_semantics = [#tpu.dimension_semantics<parallel>, #tpu.dimension_semantics<parallel>, #tpu.dimension_semantics<arbitrary>], iteration_bounds = array<i64: 74, 1, 1>, scalar_prefetch = 0 : i64, scratch_operands = 1 : i64, tpu.core_type = #tpu.core_type<tc>, window_params = [{transform_indices = @transform_0, window_bounds = array<i64: 512, 27>}, {transform_indices = @transform_1, window_bounds = array<i64: 27, 64>}, {transform_indices = @transform_2, window_bounds = array<i64: 1, 64>}, {transform_indices = @transform_3, window_bounds = array<i64: 512, 64>}]} {
    %c0_i32 = arith.constant 0 : i32
    %0 = arith.cmpi eq, %arg2, %c0_i32 : i32
    %1 = arith.extui %0 : i1 to i32
    %c0_i32_0 = arith.constant 0 : i32
    %2 = arith.cmpi ne, %1, %c0_i32_0 : i32
    scf.if %2 {
      %cst_10 = arith.constant 0.000000e+00 : f32
      %12 = vector.broadcast %cst_10 : f32 to vector<512x64xf32>
      %c0_11 = arith.constant 0 : index
      %c0_12 = arith.constant 0 : index
      %13 = vector.load %arg7[%c0_11, %c0_12] : memref<512x64xf32, #tpu.memory_space<vmem>>, vector<512x64xf32>
      tpu.vector_store %arg7[%c0_11, %c0_12], %12 {strides = array<i32>} : memref<512x64xf32, #tpu.memory_space<vmem>>, vector<512x64xf32>,
    } else {
    }
    %c0 = arith.constant 0 : index
    %c0_1 = arith.constant 0 : index
    %3 = vector.load %arg7[%c0, %c0_1] : memref<512x64xf32, #tpu.memory_space<vmem>>, vector<512x64xf32>
    %c0_2 = arith.constant 0 : index
    %c0_3 = arith.constant 0 : index
    %4 = vector.load %arg3[%c0_2, %c0_3] : memref<512x27xbf16, #tpu.memory_space<vmem>>, vector<512x27xbf16>
    %c0_4 = arith.constant 0 : index
    %c0_5 = arith.constant 0 : index
    %5 = vector.load %arg4[%c0_4, %c0_5] : memref<27x64xbf16, #tpu.memory_space<vmem>>, vector<27x64xbf16>
    %cst = arith.constant dense<0.000000e+00> : vector<512x64xf32>
    %6 = tpu.matmul %4, %5, %cst {dimension_numbers = #tpu.dot_dimension_numbers<[1], [0], [0], [1], [0, 0, 1, 1], [], []>} : vector<512x27xbf16>, vector<27x64xbf16>, vector<512x64xf32> -> vector<512x64xf32>
    %7 = arith.addf %3, %6 : vector<512x64xf32>
    %c0_6 = arith.constant 0 : index
    %c0_7 = arith.constant 0 : index
    %8 = vector.load %arg7[%c0_6, %c0_7] : memref<512x64xf32, #tpu.memory_space<vmem>>, vector<512x64xf32>
    tpu.vector_store %arg7[%c0_6, %c0_7], %7 {strides = array<i32>} : memref<512x64xf32, #tpu.memory_space<vmem>>, vector<512x64xf32>,
    %c0_i32_8 = arith.constant 0 : i32
    %9 = arith.cmpi eq, %arg2, %c0_i32_8 : i32
    %10 = arith.extui %9 : i1 to i32
    %c0_i32_9 = arith.constant 0 : i32
    %11 = arith.cmpi ne, %10, %c0_i32_9 : i32
    scf.if %11 {
      %c0_10 = arith.constant 0 : index
      %c0_11 = arith.constant 0 : index
      %12 = vector.load %arg7[%c0_10, %c0_11] : memref<512x64xf32, #tpu.memory_space<vmem>>, vector<512x64xf32>
      %c0_12 = arith.constant 0 : index
      %c0_13 = arith.constant 0 : index
      %13 = vector.load %arg5[%c0_12, %c0_13] : memref<1x64xf32, #tpu.memory_space<vmem>>, vector<1x64xf32>
      %14 = vector.broadcast %13 : vector<1x64xf32> to vector<512x64xf32>
      %15 = arith.addf %12, %14 : vector<512x64xf32>
      %cst_14 = arith.constant 0.000000e+00 : f32
      %16 = vector.broadcast %cst_14 : f32 to vector<512x64xf32>
      %17 = arith.maximumf %15, %16 : vector<512x64xf32>
      %c0_15 = arith.constant 0 : index
      %c0_16 = arith.constant 0 : index
      %18 = vector.load %arg6[%c0_15, %c0_16] : memref<512x64xf32, #tpu.memory_space<vmem>>, vector<512x64xf32>
      tpu.vector_store %arg6[%c0_15, %c0_16], %17 {strides = array<i32>} : memref<512x64xf32, #tpu.memory_space<vmem>>, vector<512x64xf32>,
    } else {
    }
    return
  }
  func.func @transform_0(%arg0: i32, %arg1: i32, %arg2: i32) -> (i32, i32) {
    %c0_i32 = arith.constant 0 : i32
    return %arg0, %arg2 : i32, i32
  }
  func.func @transform_1(%arg0: i32, %arg1: i32, %arg2: i32) -> (i32, i32) {
    %c0_i32 = arith.constant 0 : i32
    return %arg2, %arg1 : i32, i32
  }
  func.func @transform_2(%arg0: i32, %arg1: i32, %arg2: i32) -> (i32, i32) {
    %c0_i32 = arith.constant 0 : i32
    %c0_i32_0 = arith.constant 0 : i32
    return %c0_i32, %arg1 : i32, i32
  }
  func.func @transform_3(%arg0: i32, %arg1: i32, %arg2: i32) -> (i32, i32) {
    %c0_i32 = arith.constant 0 : i32
    return %arg0, %arg1 : i32, i32
  }
}

</mosaic_0001>

<llo_original>
// kernel: tpu_custom_call.1
$region0: #{tpu_custom_call.1}
  #allocation0 [shape = 'u32[]', space=smem, size = 0x4, offset = 0x4, fixed_abs, tag = 'smem constant byte address 0x4 - core index']
  #allocation1 [shape = 'u32[72,128]{1,0:T(1,128)}', space=vmem, size = 0x9000, scoped, tag = 'internal scratch']
  #allocation2 [shape = 'f32[512,64]{1,0:T(8,128)}', space=vmem, size = 0x40000, scoped, tag = 'scratch operand']
  %s0 = inlined_call_operand.vmem [shape: bf16[37636,27], index: 0, kind: input, shape index: {}]
  %s1 = inlined_call_operand.vmem [shape: bf16[27,64], index: 1, kind: input, shape index: {}]
  %s2 = inlined_call_operand.vmem [shape: f32[1,64], index: 2, kind: input, shape index: {}]
  %s3 = inlined_call_operand.vmem [shape: f32[37636,64], index: 3, kind: output, shape index: {}]
  %s4 = sld [smem:[#allocation0]]
  $region101: #{tpu_custom_call.1} parent=0
    _
  %s6 = ssub.s32 1, %s4
  %s7 = scalar_select 0, %s6, %s4
  $region1: #{tpu_custom_call.1} parent=0
    #allocation3 [shape = 'u8[524288]{0}', space=vmem, size = 0x80000, scoped, tag = 'output window, operand 0']
    loop: start=0, step=1, limit=76
    $region2: #{tpu_custom_call.1} parent=1 // loop_pre_header
      _
    $region3: #{tpu_custom_call.1} parent=1 // loop_header
      %s9 = sphi 0, %s13
      %p10 = scmp.ge.s32.totalorder %s9, 76
      %s16 = sphi 0, %s35
      %s17 = sphi 0, %s31
      %s18 = sphi 0, %s27
      %s19 = sphi 0, %s16
      %s20 = sphi 0, %s17
      %s21 = sphi 0, %s18
      %s22 = sphi 0, %s19
      %s23 = sphi 0, %s20
      %s24 = sphi 0, %s21
      %s40 = sphi 0, %s42
      %s43 = sphi 0, %s40
      %s44 = sphi 0, %s43
      %s60 = sphi 0, %s44
      %s68 = sphi 0, %s70
      %s71 = sphi 0, %s68
      %s72 = sphi 0, %s71
      %s88 = sphi 0, %s72
      %s94 = sphi 0, %s96
      %s97 = sphi 0, %s94
      %s98 = sphi 0, %s97
      %s114 = sphi 0, %s98
      %s122 = sphi 0, %s124
      %s125 = sphi 0, %s122
      %s126 = sphi 0, %s125
      %s142 = sphi 0, %s126
    $region4: #{tpu_custom_call.1} parent=1 // loop_header_branch
      %12 = sbr.rel (%p10) target = $region8
    $region5: #{tpu_custom_call.1} parent=1 // loop_body
      %s14 = ssub.s32 %s9, 1
      %s15 = ssub.s32 %s9, 2
      %s25 = sadd.s32 1, %s18
      %p26 = scmp.ge.s32.totalorder %s25, 1
      %s27 = scalar_select %p26, 0, %s25
      %s28 = sadd.s32 1, %s17
      %s29 = scalar_select %p26, %s28, %s17
      %p30 = scmp.ge.s32.totalorder %s29, 1
      %s31 = scalar_select %p30, 0, %s29
      %s32 = sadd.s32 1, %s16
      %s33 = scalar_select %p30, %s32, %s16
      %p34 = scmp.ge.s32.totalorder %s33, 74
      %s35 = scalar_select %p34, 0, %s33
      %s36 = ssub.s32 %s16, %s35
      %s37 = ssub.s32 %s18, %s27
      %s38 = sor.u32 %s36, %s37
      %p39 = scmp.eq.s32.totalorder %s38, 0
      %s41 = sadd.s32 %s40, 1
      %s42 = scalar_select %p39, %s40, %s41
      %p45 = pneg %p39
      %p46 = scmp.eq.s32.totalorder %s9, 73
      %p47 = por %p45, %p46
      %p48 = scmp.ne.s32.totalorder %s40, %s43
      %p49 = scmp.eq.s32.totalorder %s9, 0
      %p50 = por %p48, %p49
      %p51 = scmp.ne.s32.totalorder %s40, %s43
      %p52 = scmp.eq.s32.totalorder %s14, 73
      %p53 = por %p51, %p52
      %p54 = scmp.ne.s32.totalorder %s43, %s44
      %p55 = scmp.eq.s32.totalorder %s14, 0
      %p56 = por %p54, %p55
      %p57 = scmp.ne.s32.totalorder %s43, %s44
      %p58 = scmp.eq.s32.totalorder %s15, 73
      %p59 = por %p57, %p58
      %p61 = scmp.ne.s32.totalorder %s44, %s60
      %p62 = scmp.eq.s32.totalorder %s15, 0
      %p63 = por %p61, %p62
      %s64 = ssub.s32 %s18, %s27
      %s65 = ssub.s32 %s17, %s31
      %s66 = sor.u32 %s64, %s65
      %p67 = scmp.eq.s32.totalorder %s66, 0
      %s69 = sadd.s32 %s68, 1
      %s70 = scalar_select %p67, %s68, %s69
      %p73 = pneg %p67
      %p74 = scmp.eq.s32.totalorder %s9, 73
      %p75 = por %p73, %p74
      %p76 = scmp.ne.s32.totalorder %s68, %s71
      %p77 = scmp.eq.s32.totalorder %s9, 0
      %p78 = por %p76, %p77
      %p79 = scmp.ne.s32.totalorder %s68, %s71
      %p80 = scmp.eq.s32.totalorder %s14, 73
      %p81 = por %p79, %p80
      %p82 = scmp.ne.s32.totalorder %s71, %s72
      %p83 = scmp.eq.s32.totalorder %s14, 0
      %p84 = por %p82, %p83
      %p85 = scmp.ne.s32.totalorder %s71, %s72
      %p86 = scmp.eq.s32.totalorder %s15, 73
      %p87 = por %p85, %p86
      %p89 = scmp.ne.s32.totalorder %s72, %s88
      %p90 = scmp.eq.s32.totalorder %s15, 0
      %p91 = por %p89, %p90
      %s92 = ssub.s32 %s17, %s31
      %p93 = scmp.eq.s32.totalorder %s92, 0
      %s95 = sadd.s32 %s94, 1
      %s96 = scalar_select %p93, %s94, %s95
      %p99 = pneg %p93
      %p100 = scmp.eq.s32.totalorder %s9, 73
      %p101 = por %p99, %p100
      %p102 = scmp.ne.s32.totalorder %s94, %s97
      %p103 = scmp.eq.s32.totalorder %s9, 0
      %p104 = por %p102, %p103
      %p105 = scmp.ne.s32.totalorder %s94, %s97
      %p106 = scmp.eq.s32.totalorder %s14, 73
      %p107 = por %p105, %p106
      %p108 = scmp.ne.s32.totalorder %s97, %s98
      %p109 = scmp.eq.s32.totalorder %s14, 0
      %p110 = por %p108, %p109
      %p111 = scmp.ne.s32.totalorder %s97, %s98
      %p112 = scmp.eq.s32.totalorder %s15, 73
      %p113 = por %p111, %p112
      %p115 = scmp.ne.s32.totalorder %s98, %s114
      %p116 = scmp.eq.s32.totalorder %s15, 0
      %p117 = por %p115, %p116
      %s118 = ssub.s32 %s16, %s35
      %s119 = ssub.s32 %s17, %s31
      %s120 = sor.u32 %s118, %s119
      %p121 = scmp.eq.s32.totalorder %s120, 0
      %s123 = sadd.s32 %s122, 1
      %s124 = scalar_select %p121, %s122, %s123
      %p127 = pneg %p121
      %p128 = scmp.eq.s32.totalorder %s9, 73
      %p129 = por %p127, %p128
      %p130 = scmp.ne.s32.totalorder %s122, %s125
      %p131 = scmp.eq.s32.totalorder %s9, 0
      %p132 = por %p130, %p131
      %p133 = scmp.ne.s32.totalorder %s122, %s125
      %p134 = scmp.eq.s32.totalorder %s14, 73
      %p135 = por %p133, %p134
      %p136 = scmp.ne.s32.totalorder %s125, %s126
      %p137 = scmp.eq.s32.totalorder %s14, 0
      %p138 = por %p136, %p137
      %p139 = scmp.ne.s32.totalorder %s125, %s126
      %p140 = scmp.eq.s32.totalorder %s15, 73
      %p141 = por %p139, %p140
      %p143 = scmp.ne.s32.totalorder %s126, %s142
      %p144 = scmp.eq.s32.totalorder %s15, 0
      %p145 = por %p143, %p144
      %p146 = scmp.le.s32.totalorder 1, %s9
      %p147 = scmp.lt.s32.totalorder %s9, 75
      %p148 = pnand %p146, %p147
      %p149 = pneg %p148
      // Predicated region
      $region9: #{tpu_custom_call.1} parent=5 // pred_check
        _
      $region10: #{tpu_custom_call.1} parent=5 // pred_check_branch
        %151 = sbr.rel (%p148) target = $region12
      $region11: #{tpu_custom_call.1} parent=5 // pred_region
        %s152 = ssub.s32 %s9, 1
        // Predicated region
        $region13: #{tpu_custom_call.1} parent=11 // pred_check
          %p153 = pneg %p84
        $region14: #{tpu_custom_call.1} parent=11 // pred_check_branch
          %155 = sbr.rel (%p153) target = $region16
        $region15: #{tpu_custom_call.1} parent=11 // pred_region
          %s156 = smul.u32 4, %s21
          %p157 = scmp.lt.s32.totalorder %s156, 3
          %s158 = scalar_select %p157, %s156, 3
          %p159 = scmp.lt.s32.totalorder %s20, 0
          %s160 = scalar_select %p159, %s20, 0
          %s161 = sadd.s32 %s160, %s158
          %s162 = smul.addr %s161, 4
          %s163 = scalar_lea.vmem %s1, %s162
          %s164 = smul.u32 4, %s21
        $region16: #{tpu_custom_call.1} parent=11 // pred_fallthru
          _
        // Predicated region
        $region17: #{tpu_custom_call.1} parent=11 // pred_check
          %p165 = pneg %p110
        $region18: #{tpu_custom_call.1} parent=11 // pred_check_branch
          %167 = sbr.rel (%p165) target = $region20
        $region19: #{tpu_custom_call.1} parent=11 // pred_region
          %p168 = scmp.lt.s32.totalorder %s20, 0
          %s169 = scalar_select %p168, %s20, 0
          %s170 = scalar_lea.vmem %s2, %s169
        $region20: #{tpu_custom_call.1} parent=11 // pred_fallthru
          _
      $region12: #{tpu_custom_call.1} parent=5 // pred_fallthru
        _
      %p171 = scmp.lt.s32.totalorder %s9, 74
      // Predicated region
      $region21: #{tpu_custom_call.1} parent=5 // pred_check
        %p172 = pneg %p171
      $region22: #{tpu_custom_call.1} parent=5 // pred_check_branch
        %174 = sbr.rel (%p172) target = $region24
      $region23: #{tpu_custom_call.1} parent=5 // pred_region
        // Predicated region
        $region25: #{tpu_custom_call.1} parent=23 // pred_check
          %p175 = pneg %p50
        $region26: #{tpu_custom_call.1} parent=23 // pred_check_branch
          %177 = sbr.rel (%p175) target = $region28
        $region27: #{tpu_custom_call.1} parent=23 // pred_region
          %s178 = smul.u32 64, %s16
          %s179 = ssub.s32 4705, %s178
          %p180 = scmp.lt.s32.totalorder %s179, 64
          %s181 = scalar_select %p180, %s179, 64
          %s182 = smul.u32 4, %s181
          %p183 = scmp.lt.s32.totalorder %s178, 4704
          %s184 = scalar_select %p183, %s178, 4704
          %p185 = scmp.lt.s32.totalorder %s18, 0
          %s186 = scalar_select %p185, %s18, 0
          %s187 = sadd.s32 %s186, %s184
          %s188 = smul.addr %s187, 4
          %s189 = scalar_lea.vmem %s0, %s188
          %s190 = smul.u32 64, %s16
          %s191 = ssub.s32 4705, %s190
          %p192 = scmp.lt.s32.totalorder %s191, 64
          %s193 = scalar_select %p192, %s191, 64
          %s194 = smul.u32 4, %s193
        $region28: #{tpu_custom_call.1} parent=23 // pred_fallthru
          _
      $region24: #{tpu_custom_call.1} parent=5 // pred_fallthru
        _
      %p195 = scmp.le.s32.totalorder 1, %s9
      %p196 = scmp.lt.s32.totalorder %s9, 75
      %p197 = pnand %p195, %p196
      %p198 = pneg %p197
      // Predicated region
      $region29: #{tpu_custom_call.1} parent=5 // pred_check
        _
      $region30: #{tpu_custom_call.1} parent=5 // pred_check_branch
        %200 = sbr.rel (%p197) target = $region32
      $region31: #{tpu_custom_call.1} parent=5 // pred_region
        %s201 = ssub.s32 %s9, 1
        %s202 = smul.u32 64, %s19
        %s203 = ssub.s32 4705, %s202
        %p204 = scmp.lt.s32.totalorder %s203, 64
        %s205 = scalar_select %p204, %s203, 64
        %s206 = smul.u32 4, %s205
        %p207 = scmp.lt.s32.totalorder %s202, 4704
        %s208 = scalar_select %p207, %s202, 4704
        %p209 = scmp.lt.s32.totalorder %s21, 0
        %s210 = scalar_select %p209, %s21, 0
        %s211 = sadd.s32 %s210, %s208
        %s212 = smul.addr %s211, 4
        %s213 = scalar_lea.vmem %s0, %s212
        %p214 = pneg %p56
        %p215 = pneg %p53
        %s216 = smul.u32 4, %s21
        %p217 = scmp.lt.s32.totalorder %s216, 3
        %s218 = scalar_select %p217, %s216, 3
        %p219 = scmp.lt.s32.totalorder %s20, 0
        %s220 = scalar_select %p219, %s20, 0
        %s221 = sadd.s32 %s220, %s218
        %s222 = smul.addr %s221, 4
        %s223 = scalar_lea.vmem %s1, %s222
        %p224 = pneg %p84
        %p225 = pneg %p81
        %p226 = scmp.lt.s32.totalorder %s20, 0
        %s227 = scalar_select %p226, %s20, 0
        %s228 = scalar_lea.vmem %s2, %s227
        %p229 = pneg %p110
        %p230 = pneg %p107
        %p231 = pneg %p138
        %p232 = pneg %p135
        %s233 = sand.u32 %s125, 1
        %s234 = sand.u32 %s125, 1
        %s235 = smul.addr %s234, 512
        %s236 = scalar_lea.vmem [#allocation3], %s235
        %s237 = smul.u32 64, %s19
        %s238 = ssub.s32 4705, %s237
        %p239 = scmp.lt.s32.totalorder %s238, 64
        %s240 = scalar_select %p239, %s238, 64
        %s241 = smul.u32 4, %s240
        %p242 = scmp.lt.s32.totalorder %s237, 4704
        %s243 = scalar_select %p242, %s237, 4704
        %p244 = scmp.lt.s32.totalorder %s21, 0
        %s245 = scalar_select %p244, %s21, 0
        %s246 = sadd.s32 %s245, %s243
        %s247 = smul.addr %s246, 4
        %s248 = scalar_lea.vmem %s0, %s247
        %s249 = smul.u32 64, %s19
        %s250 = ssub.s32 4705, %s249
        %p251 = scmp.lt.s32.totalorder %s250, 64
        %s252 = scalar_select %p251, %s250, 64
        %s253 = smul.u32 4, %s252
        %s254 = smul.u32 4, %s21
        %p255 = scmp.lt.s32.totalorder %s254, 3
        %s256 = scalar_select %p255, %s254, 3
        %p257 = scmp.lt.s32.totalorder %s20, 0
        %s258 = scalar_select %p257, %s20, 0
        %s259 = sadd.s32 %s258, %s256
        %s260 = smul.addr %s259, 4
        %s261 = scalar_lea.vmem %s1, %s260
        %s262 = smul.u32 4, %s21
        %p263 = scmp.lt.s32.totalorder %s20, 0
        %s264 = scalar_select %p263, %s20, 0
        %s265 = scalar_lea.vmem %s2, %s264
        %s266 = smul.u32 64, %s19
        %s267 = ssub.s32 4705, %s266
        %p268 = scmp.lt.s32.totalorder %s267, 64
        %s269 = scalar_select %p268, %s267, 64
        %s270 = smul.u32 8, %s269
        %p272 = scmp.eq.s32.totalorder %s21, 0
        // Predicated region
        $region33: #{tpu_custom_call.1} parent=31 // pred_check
          %p273 = pneg %p272
        $region34: #{tpu_custom_call.1} parent=31 // pred_check_branch
          %275 = sbr.rel (%p273) target = $region36
        $region35: #{tpu_custom_call.1} parent=31 // pred_region
          %vm276 = vcmask 523264
          %277 = vst.msk [vmem:[#allocation2] sm:$0xff] %vm276, 0.0
          %278 = vst.msk [vmem:[#allocation2 + $0x8] sm:$0xff] %vm276, 0.0
          %279 = vst.msk [vmem:[#allocation2 + $0x10] sm:$0xff] %vm276, 0.0
          %280 = vst.msk [vmem:[#allocation2 + $0x18] sm:$0xff] %vm276, 0.0
          %281 = vst.msk [vmem:[#allocation2 + $0x20] sm:$0xff] %vm276, 0.0
          %282 = vst.msk [vmem:[#allocation2 + $0x28] sm:$0xff] %vm276, 0.0
          %283 = vst.msk [vmem:[#allocation2 + $0x30] sm:$0xff] %vm276, 0.0
          %284 = vst.msk [vmem:[#allocation2 + $0x38] sm:$0xff] %vm276, 0.0
          %285 = vst.msk [vmem:[#allocation2 + $0x40] sm:$0xff] %vm276, 0.0
          %286 = vst.msk [vmem:[#allocation2 + $0x48] sm:$0xff] %vm276, 0.0
          %287 = vst.msk [vmem:[#allocation2 + $0x50] sm:$0xff] %vm276, 0.0
          %288 = vst.msk [vmem:[#allocation2 + $0x58] sm:$0xff] %vm276, 0.0
          %289 = vst.msk [vmem:[#allocation2 + $0x60] sm:$0xff] %vm276, 0.0
          %290 = vst.msk [vmem:[#allocation2 + $0x68] sm:$0xff] %vm276, 0.0
          %291 = vst.msk [vmem:[#allocation2 + $0x70] sm:$0xff] %vm276, 0.0
          %292 = vst.msk [vmem:[#allocation2 + $0x78] sm:$0xff] %vm276, 0.0
          %293 = vst.msk [vmem:[#allocation2 + $0x80] sm:$0xff] %vm276, 0.0
          %294 = vst.msk [vmem:[#allocation2 + $0x88] sm:$0xff] %vm276, 0.0
          %295 = vst.msk [vmem:[#allocation2 + $0x90] sm:$0xff] %vm276, 0.0
          %296 = vst.msk [vmem:[#allocation2 + $0x98] sm:$0xff] %vm276, 0.0
          %297 = vst.msk [vmem:[#allocation2 + $0xa0] sm:$0xff] %vm276, 0.0
          %298 = vst.msk [vmem:[#allocation2 + $0xa8] sm:$0xff] %vm276, 0.0
          %299 = vst.msk [vmem:[#allocation2 + $0xb0] sm:$0xff] %vm276, 0.0
          %300 = vst.msk [vmem:[#allocation2 + $0xb8] sm:$0xff] %vm276, 0.0
          %301 = vst.msk [vmem:[#allocation2 + $0xc0] sm:$0xff] %vm276, 0.0
          %302 = vst.msk [vmem:[#allocation2 + $0xc8] sm:$0xff] %vm276, 0.0
          %303 = vst.msk [vmem:[#allocation2 + $0xd0] sm:$0xff] %vm276, 0.0
          %304 = vst.msk [vmem:[#allocation2 + $0xd8] sm:$0xff] %vm276, 0.0
          %305 = vst.msk [vmem:[#allocation2 + $0xe0] sm:$0xff] %vm276, 0.0
          %306 = vst.msk [vmem:[#allocation2 + $0xe8] sm:$0xff] %vm276, 0.0
          %307 = vst.msk [vmem:[#allocation2 + $0xf0] sm:$0xff] %vm276, 0.0
          %308 = vst.msk [vmem:[#allocation2 + $0xf8] sm:$0xff] %vm276, 0.0
          %309 = vst.msk [vmem:[#allocation2 + $0x100] sm:$0xff] %vm276, 0.0
          %310 = vst.msk [vmem:[#allocation2 + $0x108] sm:$0xff] %vm276, 0.0
          %311 = vst.msk [vmem:[#allocation2 + $0x110] sm:$0xff] %vm276, 0.0
          %312 = vst.msk [vmem:[#allocation2 + $0x118] sm:$0xff] %vm276, 0.0
          %313 = vst.msk [vmem:[#allocation2 + $0x120] sm:$0xff] %vm276, 0.0
          %314 = vst.msk [vmem:[#allocation2 + $0x128] sm:$0xff] %vm276, 0.0
          %315 = vst.msk [vmem:[#allocation2 + $0x130] sm:$0xff] %vm276, 0.0
          %316 = vst.msk [vmem:[#allocation2 + $0x138] sm:$0xff] %vm276, 0.0
          %317 = vst.msk [vmem:[#allocation2 + $0x140] sm:$0xff] %vm276, 0.0
          %318 = vst.msk [vmem:[#allocation2 + $0x148] sm:$0xff] %vm276, 0.0
          %319 = vst.msk [vmem:[#allocation2 + $0x150] sm:$0xff] %vm276, 0.0
          %320 = vst.msk [vmem:[#allocation2 + $0x158] sm:$0xff] %vm276, 0.0
          %321 = vst.msk [vmem:[#allocation2 + $0x160] sm:$0xff] %vm276, 0.0
          %322 = vst.msk [vmem:[#allocation2 + $0x168] sm:$0xff] %vm276, 0.0
          %323 = vst.msk [vmem:[#allocation2 + $0x170] sm:$0xff] %vm276, 0.0
          %324 = vst.msk [vmem:[#allocation2 + $0x178] sm:$0xff] %vm276, 0.0
          %325 = vst.msk [vmem:[#allocation2 + $0x180] sm:$0xff] %vm276, 0.0
          %326 = vst.msk [vmem:[#allocation2 + $0x188] sm:$0xff] %vm276, 0.0
          %327 = vst.msk [vmem:[#allocation2 + $0x190] sm:$0xff] %vm276, 0.0
          %328 = vst.msk [vmem:[#allocation2 + $0x198] sm:$0xff] %vm276, 0.0
          %329 = vst.msk [vmem:[#allocation2 + $0x1a0] sm:$0xff] %vm276, 0.0
          %330 = vst.msk [vmem:[#allocation2 + $0x1a8] sm:$0xff] %vm276, 0.0
          %331 = vst.msk [vmem:[#allocation2 + $0x1b0] sm:$0xff] %vm276, 0.0
          %332 = vst.msk [vmem:[#allocation2 + $0x1b8] sm:$0xff] %vm276, 0.0
          %333 = vst.msk [vmem:[#allocation2 + $0x1c0] sm:$0xff] %vm276, 0.0
          %334 = vst.msk [vmem:[#allocation2 + $0x1c8] sm:$0xff] %vm276, 0.0
          %335 = vst.msk [vmem:[#allocation2 + $0x1d0] sm:$0xff] %vm276, 0.0
          %336 = vst.msk [vmem:[#allocation2 + $0x1d8] sm:$0xff] %vm276, 0.0
          %337 = vst.msk [vmem:[#allocation2 + $0x1e0] sm:$0xff] %vm276, 0.0
          %338 = vst.msk [vmem:[#allocation2 + $0x1e8] sm:$0xff] %vm276, 0.0
          %339 = vst.msk [vmem:[#allocation2 + $0x1f0] sm:$0xff] %vm276, 0.0
          %340 = vst.msk [vmem:[#allocation2 + $0x1f8] sm:$0xff] %vm276, 0.0
        $region36: #{tpu_custom_call.1} parent=31 // pred_fallthru
          _
        %v341 = vld [vmem:[#allocation2] sm:$0xff]
        %v342 = vld [vmem:[#allocation2 + $0x8] sm:$0xff]
        %v343 = vld [vmem:[#allocation2 + $0x10] sm:$0xff]
        %v344 = vld [vmem:[#allocation2 + $0x18] sm:$0xff]
        %v345 = vld [vmem:[#allocation2 + $0x20] sm:$0xff]
        %v346 = vld [vmem:[#allocation2 + $0x28] sm:$0xff]
        %v347 = vld [vmem:[#allocation2 + $0x30] sm:$0xff]
        %v348 = vld [vmem:[#allocation2 + $0x38] sm:$0xff]
        %v349 = vld [vmem:[#allocation2 + $0x40] sm:$0xff]
        %v350 = vld [vmem:[#allocation2 + $0x48] sm:$0xff]
        %v351 = vld [vmem:[#allocation2 + $0x50] sm:$0xff]
        %v352 = vld [vmem:[#allocation2 + $0x58] sm:$0xff]
        %v353 = vld [vmem:[#allocation2 + $0x60] sm:$0xff]
        %v354 = vld [vmem:[#allocation2 + $0x68] sm:$0xff]
        %v355 = vld [vmem:[#allocation2 + $0x70] sm:$0xff]
        %v356 = vld [vmem:[#allocation2 + $0x78] sm:$0xff]
        %v357 = vld [vmem:[#allocation2 + $0x80] sm:$0xff]
        %v358 = vld [vmem:[#allocation2 + $0x88] sm:$0xff]
        %v359 = vld [vmem:[#allocation2 + $0x90] sm:$0xff]
        %v360 = vld [vmem:[#allocation2 + $0x98] sm:$0xff]
        %v361 = vld [vmem:[#allocation2 + $0xa0] sm:$0xff]
        %v362 = vld [vmem:[#allocation2 + $0xa8] sm:$0xff]
        %v363 = vld [vmem:[#allocation2 + $0xb0] sm:$0xff]
        %v364 = vld [vmem:[#allocation2 + $0xb8] sm:$0xff]
        %v365 = vld [vmem:[#allocation2 + $0xc0] sm:$0xff]
        %v366 = vld [vmem:[#allocation2 + $0xc8] sm:$0xff]
        %v367 = vld [vmem:[#allocation2 + $0xd0] sm:$0xff]
        %v368 = vld [vmem:[#allocation2 + $0xd8] sm:$0xff]
        %v369 = vld [vmem:[#allocation2 + $0xe0] sm:$0xff]
        %v370 = vld [vmem:[#allocation2 + $0xe8] sm:$0xff]
        %v371 = vld [vmem:[#allocation2 + $0xf0] sm:$0xff]
        %v372 = vld [vmem:[#allocation2 + $0xf8] sm:$0xff]
        %v373 = vld [vmem:[#allocation2 + $0x100] sm:$0xff]
        %v374 = vld [vmem:[#allocation2 + $0x108] sm:$0xff]
        %v375 = vld [vmem:[#allocation2 + $0x110] sm:$0xff]
        %v376 = vld [vmem:[#allocation2 + $0x118] sm:$0xff]
        %v377 = vld [vmem:[#allocation2 + $0x120] sm:$0xff]
        %v378 = vld [vmem:[#allocation2 + $0x128] sm:$0xff]
        %v379 = vld [vmem:[#allocation2 + $0x130] sm:$0xff]
        %v380 = vld [vmem:[#allocation2 + $0x138] sm:$0xff]
        %v381 = vld [vmem:[#allocation2 + $0x140] sm:$0xff]
        %v382 = vld [vmem:[#allocation2 + $0x148] sm:$0xff]
        %v383 = vld [vmem:[#allocation2 + $0x150] sm:$0xff]
        %v384 = vld [vmem:[#allocation2 + $0x158] sm:$0xff]
        %v385 = vld [vmem:[#allocation2 + $0x160] sm:$0xff]
        %v386 = vld [vmem:[#allocation2 + $0x168] sm:$0xff]
        %v387 = vld [vmem:[#allocation2 + $0x170] sm:$0xff]
        %v388 = vld [vmem:[#allocation2 + $0x178] sm:$0xff]
        %v389 = vld [vmem:[#allocation2 + $0x180] sm:$0xff]
        %v390 = vld [vmem:[#allocation2 + $0x188] sm:$0xff]
        %v391 = vld [vmem:[#allocation2 + $0x190] sm:$0xff]
        %v392 = vld [vmem:[#allocation2 + $0x198] sm:$0xff]
        %v393 = vld [vmem:[#allocation2 + $0x1a0] sm:$0xff]
        %v394 = vld [vmem:[#allocation2 + $0x1a8] sm:$0xff]
        %v395 = vld [vmem:[#allocation2 + $0x1b0] sm:$0xff]
        %v396 = vld [vmem:[#allocation2 + $0x1b8] sm:$0xff]
        %v397 = vld [vmem:[#allocation2 + $0x1c0] sm:$0xff]
        %v398 = vld [vmem:[#allocation2 + $0x1c8] sm:$0xff]
        %v399 = vld [vmem:[#allocation2 + $0x1d0] sm:$0xff]
        %v400 = vld [vmem:[#allocation2 + $0x1d8] sm:$0xff]
        %v401 = vld [vmem:[#allocation2 + $0x1e0] sm:$0xff]
        %v402 = vld [vmem:[#allocation2 + $0x1e8] sm:$0xff]
        %v403 = vld [vmem:[#allocation2 + $0x1f0] sm:$0xff]
        %v404 = vld [vmem:[#allocation2 + $0x1f8] sm:$0xff]
        %v405 = vld [vmem:[%s248] sm:$0xf]
        %v406 = vld [vmem:[%s248 + $0x4] sm:$0xf]
        %v407 = vld [vmem:[%s248 + $0x8] sm:$0xf]
        %v408 = vld [vmem:[%s248 + $0xc] sm:$0xf]
        %v409 = vld [vmem:[%s248 + $0x10] sm:$0xf]
        %v410 = vld [vmem:[%s248 + $0x14] sm:$0xf]
        %v411 = vld [vmem:[%s248 + $0x18] sm:$0xf]
        %v412 = vld [vmem:[%s248 + $0x1c] sm:$0xf]
        %v413 = vld [vmem:[%s248 + $0x20] sm:$0xf]
        %v414 = vld [vmem:[%s248 + $0x24] sm:$0xf]
        %v415 = vld [vmem:[%s248 + $0x28] sm:$0xf]
        %v416 = vld [vmem:[%s248 + $0x2c] sm:$0xf]
        %v417 = vld [vmem:[%s248 + $0x30] sm:$0xf]
        %v418 = vld [vmem:[%s248 + $0x34] sm:$0xf]
        %v419 = vld [vmem:[%s248 + $0x38] sm:$0xf]
        %v420 = vld [vmem:[%s248 + $0x3c] sm:$0xf]
        %v421 = vld [vmem:[%s248 + $0x40] sm:$0xf]
        %v422 = vld [vmem:[%s248 + $0x44] sm:$0xf]
        %v423 = vld [vmem:[%s248 + $0x48] sm:$0xf]
        %v424 = vld [vmem:[%s248 + $0x4c] sm:$0xf]
        %v425 = vld [vmem:[%s248 + $0x50] sm:$0xf]
        %v426 = vld [vmem:[%s248 + $0x54] sm:$0xf]
        %v427 = vld [vmem:[%s248 + $0x58] sm:$0xf]
        %v428 = vld [vmem:[%s248 + $0x5c] sm:$0xf]
        %v429 = vld [vmem:[%s248 + $0x60] sm:$0xf]
        %v430 = vld [vmem:[%s248 + $0x64] sm:$0xf]
        %v431 = vld [vmem:[%s248 + $0x68] sm:$0xf]
        %v432 = vld [vmem:[%s248 + $0x6c] sm:$0xf]
        %v433 = vld [vmem:[%s248 + $0x70] sm:$0xf]
        %v434 = vld [vmem:[%s248 + $0x74] sm:$0xf]
        %v435 = vld [vmem:[%s248 + $0x78] sm:$0xf]
        %v436 = vld [vmem:[%s248 + $0x7c] sm:$0xf]
        %v437 = vld [vmem:[%s248 + $0x80] sm:$0xf]
        %v438 = vld [vmem:[%s248 + $0x84] sm:$0xf]
        %v439 = vld [vmem:[%s248 + $0x88] sm:$0xf]
        %v440 = vld [vmem:[%s248 + $0x8c] sm:$0xf]
        %v441 = vld [vmem:[%s248 + $0x90] sm:$0xf]
        %v442 = vld [vmem:[%s248 + $0x94] sm:$0xf]
        %v443 = vld [vmem:[%s248 + $0x98] sm:$0xf]
        %v444 = vld [vmem:[%s248 + $0x9c] sm:$0xf]
        %v445 = vld [vmem:[%s248 + $0xa0] sm:$0xf]
        %v446 = vld [vmem:[%s248 + $0xa4] sm:$0xf]
        %v447 = vld [vmem:[%s248 + $0xa8] sm:$0xf]
        %v448 = vld [vmem:[%s248 + $0xac] sm:$0xf]
        %v449 = vld [vmem:[%s248 + $0xb0] sm:$0xf]
        %v450 = vld [vmem:[%s248 + $0xb4] sm:$0xf]
        %v451 = vld [vmem:[%s248 + $0xb8] sm:$0xf]
        %v452 = vld [vmem:[%s248 + $0xbc] sm:$0xf]
        %v453 = vld [vmem:[%s248 + $0xc0] sm:$0xf]
        %v454 = vld [vmem:[%s248 + $0xc4] sm:$0xf]
        %v455 = vld [vmem:[%s248 + $0xc8] sm:$0xf]
        %v456 = vld [vmem:[%s248 + $0xcc] sm:$0xf]
        %v457 = vld [vmem:[%s248 + $0xd0] sm:$0xf]
        %v458 = vld [vmem:[%s248 + $0xd4] sm:$0xf]
        %v459 = vld [vmem:[%s248 + $0xd8] sm:$0xf]
        %v460 = vld [vmem:[%s248 + $0xdc] sm:$0xf]
        %v461 = vld [vmem:[%s248 + $0xe0] sm:$0xf]
        %v462 = vld [vmem:[%s248 + $0xe4] sm:$0xf]
        %v463 = vld [vmem:[%s248 + $0xe8] sm:$0xf]
        %v464 = vld [vmem:[%s248 + $0xec] sm:$0xf]
        %v465 = vld [vmem:[%s248 + $0xf0] sm:$0xf]
        %v466 = vld [vmem:[%s248 + $0xf4] sm:$0xf]
        %v467 = vld [vmem:[%s248 + $0xf8] sm:$0xf]
        %v468 = vld [vmem:[%s248 + $0xfc] sm:$0xf]
        %v469 = vld [vmem:[%s261] sm:$0xf]
        %v470 = vld [vmem:[%s261 + $0x4] sm:$0xf]
        %v471 = vld [vmem:[%s261 + $0x8] sm:$0xf]
        %v472 = vld [vmem:[%s261 + $0xc] sm:$0x3]
        %v537 = vunpack.c.l.b16 %v405
        %v538 = vunpack.c.l.b16 %v406
        %v539 = vunpack.c.l.b16 %v407
        %v540 = vunpack.c.l.b16 %v408
        %v541 = vunpack.c.l.b16 %v409
        %v542 = vunpack.c.l.b16 %v410
        %v543 = vunpack.c.l.b16 %v411
        %v544 = vunpack.c.l.b16 %v412
        %v545 = vunpack.c.l.b16 %v413
        %v546 = vunpack.c.l.b16 %v414
        %v547 = vunpack.c.l.b16 %v415
        %v548 = vunpack.c.l.b16 %v416
        %v549 = vunpack.c.l.b16 %v417
        %v550 = vunpack.c.l.b16 %v418
        %v551 = vunpack.c.l.b16 %v419
        %v552 = vunpack.c.l.b16 %v420
        %v553 = vunpack.c.l.b16 %v421
        %v554 = vunpack.c.l.b16 %v422
        %v555 = vunpack.c.l.b16 %v423
        %v556 = vunpack.c.l.b16 %v424
        %v557 = vunpack.c.l.b16 %v425
        %v558 = vunpack.c.l.b16 %v426
        %v559 = vunpack.c.l.b16 %v427
        %v560 = vunpack.c.l.b16 %v428
        %v561 = vunpack.c.l.b16 %v429
        %v562 = vunpack.c.l.b16 %v430
        %v563 = vunpack.c.l.b16 %v431
        %v564 = vunpack.c.l.b16 %v432
        %v565 = vunpack.c.l.b16 %v433
        %v566 = vunpack.c.l.b16 %v434
        %v567 = vunpack.c.l.b16 %v435
        %v568 = vunpack.c.l.b16 %v436
        %v569 = vunpack.c.l.b16 %v437
        %v570 = vunpack.c.l.b16 %v438
        %v571 = vunpack.c.l.b16 %v439
        %v572 = vunpack.c.l.b16 %v440
        %v573 = vunpack.c.l.b16 %v441
        %v574 = vunpack.c.l.b16 %v442
        %v575 = vunpack.c.l.b16 %v443
        %v576 = vunpack.c.l.b16 %v444
        %v577 = vunpack.c.l.b16 %v445
        %v578 = vunpack.c.l.b16 %v446
        %v579 = vunpack.c.l.b16 %v447
        %v580 = vunpack.c.l.b16 %v448
        %v581 = vunpack.c.l.b16 %v449
        %v582 = vunpack.c.l.b16 %v450
        %v583 = vunpack.c.l.b16 %v451
        %v584 = vunpack.c.l.b16 %v452
        %v585 = vunpack.c.l.b16 %v453
        %v586 = vunpack.c.l.b16 %v454
        %v587 = vunpack.c.l.b16 %v455
        %v588 = vunpack.c.l.b16 %v456
        %v589 = vunpack.c.l.b16 %v457
        %v590 = vunpack.c.l.b16 %v458
        %v591 = vunpack.c.l.b16 %v459
        %v592 = vunpack.c.l.b16 %v460
        %v593 = vunpack.c.l.b16 %v461
        %v594 = vunpack.c.l.b16 %v462
        %v595 = vunpack.c.l.b16 %v463
        %v596 = vunpack.c.l.b16 %v464
        %v597 = vunpack.c.l.b16 %v465
        %v598 = vunpack.c.l.b16 %v466
        %v599 = vunpack.c.l.b16 %v467
        %v600 = vunpack.c.l.b16 %v468
        %v601 = vpack.c.b16 %v538, %v537
        %v602 = vpack.c.b16 %v540, %v539
        %v603 = vpack.c.b16 %v542, %v541
        %v604 = vpack.c.b16 %v544, %v543
        %v605 = vpack.c.b16 %v546, %v545
        %v606 = vpack.c.b16 %v548, %v547
        %v607 = vpack.c.b16 %v550, %v549
        %v608 = vpack.c.b16 %v552, %v551
        %v609 = vpack.c.b16 %v554, %v553
        %v610 = vpack.c.b16 %v556, %v555
        %v611 = vpack.c.b16 %v558, %v557
        %v612 = vpack.c.b16 %v560, %v559
        %v613 = vpack.c.b16 %v562, %v561
        %v614 = vpack.c.b16 %v564, %v563
        %v615 = vpack.c.b16 %v566, %v565
        %v616 = vpack.c.b16 %v568, %v567
        %v617 = vpack.c.b16 %v570, %v569
        %v618 = vpack.c.b16 %v572, %v571
        %v619 = vpack.c.b16 %v574, %v573
        %v620 = vpack.c.b16 %v576, %v575
        %v621 = vpack.c.b16 %v578, %v577
        %v622 = vpack.c.b16 %v580, %v579
        %v623 = vpack.c.b16 %v582, %v581
        %v624 = vpack.c.b16 %v584, %v583
        %v625 = vpack.c.b16 %v586, %v585
        %v626 = vpack.c.b16 %v588, %v587
        %v627 = vpack.c.b16 %v590, %v589
        %v628 = vpack.c.b16 %v592, %v591
        %v629 = vpack.c.b16 %v594, %v593
        %v630 = vpack.c.b16 %v596, %v595
        %v631 = vpack.c.b16 %v598, %v597
        %v632 = vpack.c.b16 %v600, %v599
        %v637 = vunpack.c.l.b16 %v469
        %v638 = vunpack.c.l.b16 %v470
        %v639 = vunpack.c.l.b16 %v471
        %v640 = vunpack.c.l.b16 %v472
        %v641 = vpack.c.b16 %v638, %v637
        %v642 = vpack.c.b16 %v640, %v639
        %vm644 = vcmask 220160
        %v646 = vsel %vm644, %v601, 0
        %v649 = vsel %vm644, %v602, 0
        %v652 = vsel %vm644, %v603, 0
        %v655 = vsel %vm644, %v604, 0
        %v658 = vsel %vm644, %v605, 0
        %v661 = vsel %vm644, %v606, 0
        %v664 = vsel %vm644, %v607, 0
        %v667 = vsel %vm644, %v608, 0
        %v670 = vsel %vm644, %v609, 0
        %v673 = vsel %vm644, %v610, 0
        %v676 = vsel %vm644, %v611, 0
        %v679 = vsel %vm644, %v612, 0
        %v682 = vsel %vm644, %v613, 0
        %v685 = vsel %vm644, %v614, 0
        %v688 = vsel %vm644, %v615, 0
        %v691 = vsel %vm644, %v616, 0
        %v694 = vsel %vm644, %v617, 0
        %v697 = vsel %vm644, %v618, 0
        %v700 = vsel %vm644, %v619, 0
        %v703 = vsel %vm644, %v620, 0
        %v706 = vsel %vm644, %v621, 0
        %v709 = vsel %vm644, %v622, 0
        %v712 = vsel %vm644, %v623, 0
        %v715 = vsel %vm644, %v624, 0
        %v718 = vsel %vm644, %v625, 0
        %v721 = vsel %vm644, %v626, 0
        %v724 = vsel %vm644, %v627, 0
        %v727 = vsel %vm644, %v628, 0
        %v730 = vsel %vm644, %v629, 0
        %v733 = vsel %vm644, %v630, 0
        %v736 = vsel %vm644, %v631, 0
        %v739 = vsel %vm644, %v632, 0
        %vm741 = vcmask 1044480
        %vm742 = vcmask 1045504
        %v743 = vsel %vm741, 4294967295, 65535
        %v744 = vsel %vm742, %v743, 0
        %v746 = vand.u32 %v642, %v744
        %748 = vmatpush.bf16.msra.mxu0 0
        %749 = vmatpush.bf16.msra.mxu0 0
        %750 = vmatpush.bf16.msra.mxu0 0
        %751 = vmatpush.bf16.msra.mxu0 0
        %752 = vmatpush.bf16.msra.mxu0 0
        %753 = vmatpush.bf16.msra.mxu0 0
        %754 = vmatpush.bf16.msra.mxu0 %v746
        %755 = vmatpush.bf16.msra.mxu0 %v641
        %756 = vmatmul.bf16.gmra.mxu0 %v646
        %v757 = vpop.f32.mrf.mxu0
        %v758 = vadd.f32 0.0, %v757
        %v759 = vpop.f32.mrf.mxu0
        %v760 = vadd.f32 0.0, %v759
        %761 = vmatmul.bf16.gmra.mxu0 %v649
        %v762 = vpop.f32.mrf.mxu0
        %v763 = vadd.f32 0.0, %v762
        %v764 = vpop.f32.mrf.mxu0
        %v765 = vadd.f32 0.0, %v764
        %766 = vmatmul.bf16.gmra.mxu0 %v652
        %v767 = vpop.f32.mrf.mxu0
        %v768 = vadd.f32 0.0, %v767
        %v769 = vpop.f32.mrf.mxu0
        %v770 = vadd.f32 0.0, %v769
        %771 = vmatmul.bf16.gmra.mxu0 %v655
        %v772 = vpop.f32.mrf.mxu0
        %v773 = vadd.f32 0.0, %v772
        %v774 = vpop.f32.mrf.mxu0
        %v775 = vadd.f32 0.0, %v774
        %776 = vmatmul.bf16.gmra.mxu0 %v658
        %v777 = vpop.f32.mrf.mxu0
        %v778 = vadd.f32 0.0, %v777
        %v779 = vpop.f32.mrf.mxu0
        %v780 = vadd.f32 0.0, %v779
        %781 = vmatmul.bf16.gmra.mxu0 %v661
        %v782 = vpop.f32.mrf.mxu0
        %v783 = vadd.f32 0.0, %v782
        %v784 = vpop.f32.mrf.mxu0
        %v785 = vadd.f32 0.0, %v784
        %786 = vmatmul.bf16.gmra.mxu0 %v664
        %v787 = vpop.f32.mrf.mxu0
        %v788 = vadd.f32 0.0, %v787
        %v789 = vpop.f32.mrf.mxu0
        %v790 = vadd.f32 0.0, %v789
        %791 = vmatmul.bf16.gmra.mxu0 %v667
        %v792 = vpop.f32.mrf.mxu0
        %v793 = vadd.f32 0.0, %v792
        %v794 = vpop.f32.mrf.mxu0
        %v795 = vadd.f32 0.0, %v794
        %796 = vmatmul.bf16.gmra.mxu0 %v670
        %v797 = vpop.f32.mrf.mxu0
        %v798 = vadd.f32 0.0, %v797
        %v799 = vpop.f32.mrf.mxu0
        %v800 = vadd.f32 0.0, %v799
        %801 = vmatmul.bf16.gmra.mxu0 %v673
        %v802 = vpop.f32.mrf.mxu0
        %v803 = vadd.f32 0.0, %v802
        %v804 = vpop.f32.mrf.mxu0
        %v805 = vadd.f32 0.0, %v804
        %806 = vmatmul.bf16.gmra.mxu0 %v676
        %v807 = vpop.f32.mrf.mxu0
        %v808 = vadd.f32 0.0, %v807
        %v809 = vpop.f32.mrf.mxu0
        %v810 = vadd.f32 0.0, %v809
        %811 = vmatmul.bf16.gmra.mxu0 %v679
        %v812 = vpop.f32.mrf.mxu0
        %v813 = vadd.f32 0.0, %v812
        %v814 = vpop.f32.mrf.mxu0
        %v815 = vadd.f32 0.0, %v814
        %816 = vmatmul.bf16.gmra.mxu0 %v682
        %v817 = vpop.f32.mrf.mxu0
        %v818 = vadd.f32 0.0, %v817
        %v819 = vpop.f32.mrf.mxu0
        %v820 = vadd.f32 0.0, %v819
        %821 = vmatmul.bf16.gmra.mxu0 %v685
        %v822 = vpop.f32.mrf.mxu0
        %v823 = vadd.f32 0.0, %v822
        %v824 = vpop.f32.mrf.mxu0
        %v825 = vadd.f32 0.0, %v824
        %826 = vmatmul.bf16.gmra.mxu0 %v688
        %v827 = vpop.f32.mrf.mxu0
        %v828 = vadd.f32 0.0, %v827
        %v829 = vpop.f32.mrf.mxu0
        %v830 = vadd.f32 0.0, %v829
        %831 = vmatmul.bf16.gmra.mxu0 %v691
        %v832 = vpop.f32.mrf.mxu0
        %v833 = vadd.f32 0.0, %v832
        %v834 = vpop.f32.mrf.mxu0
        %v835 = vadd.f32 0.0, %v834
        %836 = vmatmul.bf16.gmra.mxu0 %v694
        %v837 = vpop.f32.mrf.mxu0
        %v838 = vadd.f32 0.0, %v837
        %v839 = vpop.f32.mrf.mxu0
        %v840 = vadd.f32 0.0, %v839
        %841 = vmatmul.bf16.gmra.mxu0 %v697
        %v842 = vpop.f32.mrf.mxu0
        %v843 = vadd.f32 0.0, %v842
        %v844 = vpop.f32.mrf.mxu0
        %v845 = vadd.f32 0.0, %v844
        %846 = vmatmul.bf16.gmra.mxu0 %v700
        %v847 = vpop.f32.mrf.mxu0
        %v848 = vadd.f32 0.0, %v847
        %v849 = vpop.f32.mrf.mxu0
        %v850 = vadd.f32 0.0, %v849
        %851 = vmatmul.bf16.gmra.mxu0 %v703
        %v852 = vpop.f32.mrf.mxu0
        %v853 = vadd.f32 0.0, %v852
        %v854 = vpop.f32.mrf.mxu0
        %v855 = vadd.f32 0.0, %v854
        %856 = vmatmul.bf16.gmra.mxu0 %v706
        %v857 = vpop.f32.mrf.mxu0
        %v858 = vadd.f32 0.0, %v857
        %v859 = vpop.f32.mrf.mxu0
        %v860 = vadd.f32 0.0, %v859
        %861 = vmatmul.bf16.gmra.mxu0 %v709
        %v862 = vpop.f32.mrf.mxu0
        %v863 = vadd.f32 0.0, %v862
        %v864 = vpop.f32.mrf.mxu0
        %v865 = vadd.f32 0.0, %v864
        %866 = vmatmul.bf16.gmra.mxu0 %v712
        %v867 = vpop.f32.mrf.mxu0
        %v868 = vadd.f32 0.0, %v867
        %v869 = vpop.f32.mrf.mxu0
        %v870 = vadd.f32 0.0, %v869
        %871 = vmatmul.bf16.gmra.mxu0 %v715
        %v872 = vpop.f32.mrf.mxu0
        %v873 = vadd.f32 0.0, %v872
        %v874 = vpop.f32.mrf.mxu0
        %v875 = vadd.f32 0.0, %v874
        %876 = vmatmul.bf16.gmra.mxu0 %v718
        %v877 = vpop.f32.mrf.mxu0
        %v878 = vadd.f32 0.0, %v877
        %v879 = vpop.f32.mrf.mxu0
        %v880 = vadd.f32 0.0, %v879
        %881 = vmatmul.bf16.gmra.mxu0 %v721
        %v882 = vpop.f32.mrf.mxu0
        %v883 = vadd.f32 0.0, %v882
        %v884 = vpop.f32.mrf.mxu0
        %v885 = vadd.f32 0.0, %v884
        %886 = vmatmul.bf16.gmra.mxu0 %v724
        %v887 = vpop.f32.mrf.mxu0
        %v888 = vadd.f32 0.0, %v887
        %v889 = vpop.f32.mrf.mxu0
        %v890 = vadd.f32 0.0, %v889
        %891 = vmatmul.bf16.gmra.mxu0 %v727
        %v892 = vpop.f32.mrf.mxu0
        %v893 = vadd.f32 0.0, %v892
        %v894 = vpop.f32.mrf.mxu0
        %v895 = vadd.f32 0.0, %v894
        %896 = vmatmul.bf16.gmra.mxu0 %v730
        %v897 = vpop.f32.mrf.mxu0
        %v898 = vadd.f32 0.0, %v897
        %v899 = vpop.f32.mrf.mxu0
        %v900 = vadd.f32 0.0, %v899
        %901 = vmatmul.bf16.gmra.mxu0 %v733
        %v902 = vpop.f32.mrf.mxu0
        %v903 = vadd.f32 0.0, %v902
        %v904 = vpop.f32.mrf.mxu0
        %v905 = vadd.f32 0.0, %v904
        %906 = vmatmul.bf16.gmra.mxu0 %v736
        %v907 = vpop.f32.mrf.mxu0
        %v908 = vadd.f32 0.0, %v907
        %v909 = vpop.f32.mrf.mxu0
        %v910 = vadd.f32 0.0, %v909
        %911 = vmatmul.bf16.gmra.mxu0 %v739
        %v912 = vpop.f32.mrf.mxu0
        %v913 = vadd.f32 0.0, %v912
        %v914 = vpop.f32.mrf.mxu0
        %v915 = vadd.f32 0.0, %v914
        %916 = vdwg.mxu0
        %v917 = vadd.f32 %v341, %v758
        %v918 = vadd.f32 %v342, %v760
        %v919 = vadd.f32 %v343, %v763
        %v920 = vadd.f32 %v344, %v765
        %v921 = vadd.f32 %v345, %v768
        %v922 = vadd.f32 %v346, %v770
        %v923 = vadd.f32 %v347, %v773
        %v924 = vadd.f32 %v348, %v775
        %v925 = vadd.f32 %v349, %v778
        %v926 = vadd.f32 %v350, %v780
        %v927 = vadd.f32 %v351, %v783
        %v928 = vadd.f32 %v352, %v785
        %v929 = vadd.f32 %v353, %v788
        %v930 = vadd.f32 %v354, %v790
        %v931 = vadd.f32 %v355, %v793
        %v932 = vadd.f32 %v356, %v795
        %v933 = vadd.f32 %v357, %v798
        %v934 = vadd.f32 %v358, %v800
        %v935 = vadd.f32 %v359, %v803
        %v936 = vadd.f32 %v360, %v805
        %v937 = vadd.f32 %v361, %v808
        %v938 = vadd.f32 %v362, %v810
        %v939 = vadd.f32 %v363, %v813
        %v940 = vadd.f32 %v364, %v815
        %v941 = vadd.f32 %v365, %v818
        %v942 = vadd.f32 %v366, %v820
        %v943 = vadd.f32 %v367, %v823
        %v944 = vadd.f32 %v368, %v825
        %v945 = vadd.f32 %v369, %v828
        %v946 = vadd.f32 %v370, %v830
        %v947 = vadd.f32 %v371, %v833
        %v948 = vadd.f32 %v372, %v835
        %v949 = vadd.f32 %v373, %v838
        %v950 = vadd.f32 %v374, %v840
        %v951 = vadd.f32 %v375, %v843
        %v952 = vadd.f32 %v376, %v845
        %v953 = vadd.f32 %v377, %v848
        %v954 = vadd.f32 %v378, %v850
        %v955 = vadd.f32 %v379, %v853
        %v956 = vadd.f32 %v380, %v855
        %v957 = vadd.f32 %v381, %v858
        %v958 = vadd.f32 %v382, %v860
        %v959 = vadd.f32 %v383, %v863
        %v960 = vadd.f32 %v384, %v865
        %v961 = vadd.f32 %v385, %v868
        %v962 = vadd.f32 %v386, %v870
        %v963 = vadd.f32 %v387, %v873
        %v964 = vadd.f32 %v388, %v875
        %v965 = vadd.f32 %v389, %v878
        %v966 = vadd.f32 %v390, %v880
        %v967 = vadd.f32 %v391, %v883
        %v968 = vadd.f32 %v392, %v885
        %v969 = vadd.f32 %v393, %v888
        %v970 = vadd.f32 %v394, %v890
        %v971 = vadd.f32 %v395, %v893
        %v972 = vadd.f32 %v396, %v895
        %v973 = vadd.f32 %v397, %v898
        %v974 = vadd.f32 %v398, %v900
        %v975 = vadd.f32 %v399, %v903
        %v976 = vadd.f32 %v400, %v905
        %v977 = vadd.f32 %v401, %v908
        %v978 = vadd.f32 %v402, %v910
        %v979 = vadd.f32 %v403, %v913
        %v980 = vadd.f32 %v404, %v915
        %vm981 = vcmask 523264
        %982 = vst.msk [vmem:[#allocation2] sm:$0xff] %vm981, %v917
        %983 = vst.msk [vmem:[#allocation2 + $0x8] sm:$0xff] %vm981, %v918
        %984 = vst.msk [vmem:[#allocation2 + $0x10] sm:$0xff] %vm981, %v919
        %985 = vst.msk [vmem:[#allocation2 + $0x18] sm:$0xff] %vm981, %v920
        %986 = vst.msk [vmem:[#allocation2 + $0x20] sm:$0xff] %vm981, %v921
        %987 = vst.msk [vmem:[#allocation2 + $0x28] sm:$0xff] %vm981, %v922
        %988 = vst.msk [vmem:[#allocation2 + $0x30] sm:$0xff] %vm981, %v923
        %989 = vst.msk [vmem:[#allocation2 + $0x38] sm:$0xff] %vm981, %v924
        %990 = vst.msk [vmem:[#allocation2 + $0x40] sm:$0xff] %vm981, %v925
        %991 = vst.msk [vmem:[#allocation2 + $0x48] sm:$0xff] %vm981, %v926
        %992 = vst.msk [vmem:[#allocation2 + $0x50] sm:$0xff] %vm981, %v927
        %993 = vst.msk [vmem:[#allocation2 + $0x58] sm:$0xff] %vm981, %v928
        %994 = vst.msk [vmem:[#allocation2 + $0x60] sm:$0xff] %vm981, %v929
        %995 = vst.msk [vmem:[#allocation2 + $0x68] sm:$0xff] %vm981, %v930
        %996 = vst.msk [vmem:[#allocation2 + $0x70] sm:$0xff] %vm981, %v931
        %997 = vst.msk [vmem:[#allocation2 + $0x78] sm:$0xff] %vm981, %v932
        %998 = vst.msk [vmem:[#allocation2 + $0x80] sm:$0xff] %vm981, %v933
        %999 = vst.msk [vmem:[#allocation2 + $0x88] sm:$0xff] %vm981, %v934
        %1000 = vst.msk [vmem:[#allocation2 + $0x90] sm:$0xff] %vm981, %v935
        %1001 = vst.msk [vmem:[#allocation2 + $0x98] sm:$0xff] %vm981, %v936
        %1002 = vst.msk [vmem:[#allocation2 + $0xa0] sm:$0xff] %vm981, %v937
        %1003 = vst.msk [vmem:[#allocation2 + $0xa8] sm:$0xff] %vm981, %v938
        %1004 = vst.msk [vmem:[#allocation2 + $0xb0] sm:$0xff] %vm981, %v939
        %1005 = vst.msk [vmem:[#allocation2 + $0xb8] sm:$0xff] %vm981, %v940
        %1006 = vst.msk [vmem:[#allocation2 + $0xc0] sm:$0xff] %vm981, %v941
        %1007 = vst.msk [vmem:[#allocation2 + $0xc8] sm:$0xff] %vm981, %v942
        %1008 = vst.msk [vmem:[#allocation2 + $0xd0] sm:$0xff] %vm981, %v943
        %1009 = vst.msk [vmem:[#allocation2 + $0xd8] sm:$0xff] %vm981, %v944
        %1010 = vst.msk [vmem:[#allocation2 + $0xe0] sm:$0xff] %vm981, %v945
        %1011 = vst.msk [vmem:[#allocation2 + $0xe8] sm:$0xff] %vm981, %v946
        %1012 = vst.msk [vmem:[#allocation2 + $0xf0] sm:$0xff] %vm981, %v947
        %1013 = vst.msk [vmem:[#allocation2 + $0xf8] sm:$0xff] %vm981, %v948
        %1014 = vst.msk [vmem:[#allocation2 + $0x100] sm:$0xff] %vm981, %v949
        %1015 = vst.msk [vmem:[#allocation2 + $0x108] sm:$0xff] %vm981, %v950
        %1016 = vst.msk [vmem:[#allocation2 + $0x110] sm:$0xff] %vm981, %v951
        %1017 = vst.msk [vmem:[#allocation2 + $0x118] sm:$0xff] %vm981, %v952
        %1018 = vst.msk [vmem:[#allocation2 + $0x120] sm:$0xff] %vm981, %v953
        %1019 = vst.msk [vmem:[#allocation2 + $0x128] sm:$0xff] %vm981, %v954
        %1020 = vst.msk [vmem:[#allocation2 + $0x130] sm:$0xff] %vm981, %v955
        %1021 = vst.msk [vmem:[#allocation2 + $0x138] sm:$0xff] %vm981, %v956
        %1022 = vst.msk [vmem:[#allocation2 + $0x140] sm:$0xff] %vm981, %v957
        %1023 = vst.msk [vmem:[#allocation2 + $0x148] sm:$0xff] %vm981, %v958
        %1024 = vst.msk [vmem:[#allocation2 + $0x150] sm:$0xff] %vm981, %v959
        %1025 = vst.msk [vmem:[#allocation2 + $0x158] sm:$0xff] %vm981, %v960
        %1026 = vst.msk [vmem:[#allocation2 + $0x160] sm:$0xff] %vm981, %v961
        %1027 = vst.msk [vmem:[#allocation2 + $0x168] sm:$0xff] %vm981, %v962
        %1028 = vst.msk [vmem:[#allocation2 + $0x170] sm:$0xff] %vm981, %v963
        %1029 = vst.msk [vmem:[#allocation2 + $0x178] sm:$0xff] %vm981, %v964
        %1030 = vst.msk [vmem:[#allocation2 + $0x180] sm:$0xff] %vm981, %v965
        %1031 = vst.msk [vmem:[#allocation2 + $0x188] sm:$0xff] %vm981, %v966
        %1032 = vst.msk [vmem:[#allocation2 + $0x190] sm:$0xff] %vm981, %v967
        %1033 = vst.msk [vmem:[#allocation2 + $0x198] sm:$0xff] %vm981, %v968
        %1034 = vst.msk [vmem:[#allocation2 + $0x1a0] sm:$0xff] %vm981, %v969
        %1035 = vst.msk [vmem:[#allocation2 + $0x1a8] sm:$0xff] %vm981, %v970
        %1036 = vst.msk [vmem:[#allocation2 + $0x1b0] sm:$0xff] %vm981, %v971
        %1037 = vst.msk [vmem:[#allocation2 + $0x1b8] sm:$0xff] %vm981, %v972
        %1038 = vst.msk [vmem:[#allocation2 + $0x1c0] sm:$0xff] %vm981, %v973
        %1039 = vst.msk [vmem:[#allocation2 + $0x1c8] sm:$0xff] %vm981, %v974
        %1040 = vst.msk [vmem:[#allocation2 + $0x1d0] sm:$0xff] %vm981, %v975
        %1041 = vst.msk [vmem:[#allocation2 + $0x1d8] sm:$0xff] %vm981, %v976
        %1042 = vst.msk [vmem:[#allocation2 + $0x1e0] sm:$0xff] %vm981, %v977
        %1043 = vst.msk [vmem:[#allocation2 + $0x1e8] sm:$0xff] %vm981, %v978
        %1044 = vst.msk [vmem:[#allocation2 + $0x1f0] sm:$0xff] %vm981, %v979
        %1045 = vst.msk [vmem:[#allocation2 + $0x1f8] sm:$0xff] %vm981, %v980
        // Predicated region
        $region37: #{tpu_custom_call.1} parent=31 // pred_check
          %p1046 = pneg %p272
        $region38: #{tpu_custom_call.1} parent=31 // pred_check_branch
          %1048 = sbr.rel (%p1046) target = $region40
        $region39: #{tpu_custom_call.1} parent=31 // pred_region
          %v1049 = vld [vmem:[#allocation2] sm:$0xff]
          %v1050 = vld [vmem:[#allocation2 + $0x8] sm:$0xff]
          %v1051 = vld [vmem:[#allocation2 + $0x10] sm:$0xff]
          %v1052 = vld [vmem:[#allocation2 + $0x18] sm:$0xff]
          %v1053 = vld [vmem:[#allocation2 + $0x20] sm:$0xff]
          %v1054 = vld [vmem:[#allocation2 + $0x28] sm:$0xff]
          %v1055 = vld [vmem:[#allocation2 + $0x30] sm:$0xff]
          %v1056 = vld [vmem:[#allocation2 + $0x38] sm:$0xff]
          %v1057 = vld [vmem:[#allocation2 + $0x40] sm:$0xff]
          %v1058 = vld [vmem:[#allocation2 + $0x48] sm:$0xff]
          %v1059 = vld [vmem:[#allocation2 + $0x50] sm:$0xff]
          %v1060 = vld [vmem:[#allocation2 + $0x58] sm:$0xff]
          %v1061 = vld [vmem:[#allocation2 + $0x60] sm:$0xff]
          %v1062 = vld [vmem:[#allocation2 + $0x68] sm:$0xff]
          %v1063 = vld [vmem:[#allocation2 + $0x70] sm:$0xff]
          %v1064 = vld [vmem:[#allocation2 + $0x78] sm:$0xff]
          %v1065 = vld [vmem:[#allocation2 + $0x80] sm:$0xff]
          %v1066 = vld [vmem:[#allocation2 + $0x88] sm:$0xff]
          %v1067 = vld [vmem:[#allocation2 + $0x90] sm:$0xff]
          %v1068 = vld [vmem:[#allocation2 + $0x98] sm:$0xff]
          %v1069 = vld [vmem:[#allocation2 + $0xa0] sm:$0xff]
          %v1070 = vld [vmem:[#allocation2 + $0xa8] sm:$0xff]
          %v1071 = vld [vmem:[#allocation2 + $0xb0] sm:$0xff]
          %v1072 = vld [vmem:[#allocation2 + $0xb8] sm:$0xff]
          %v1073 = vld [vmem:[#allocation2 + $0xc0] sm:$0xff]
          %v1074 = vld [vmem:[#allocation2 + $0xc8] sm:$0xff]
          %v1075 = vld [vmem:[#allocation2 + $0xd0] sm:$0xff]
          %v1076 = vld [vmem:[#allocation2 + $0xd8] sm:$0xff]
          %v1077 = vld [vmem:[#allocation2 + $0xe0] sm:$0xff]
          %v1078 = vld [vmem:[#allocation2 + $0xe8] sm:$0xff]
          %v1079 = vld [vmem:[#allocation2 + $0xf0] sm:$0xff]
          %v1080 = vld [vmem:[#allocation2 + $0xf8] sm:$0xff]
          %v1081 = vld [vmem:[#allocation2 + $0x100] sm:$0xff]
          %v1082 = vld [vmem:[#allocation2 + $0x108] sm:$0xff]
          %v1083 = vld [vmem:[#allocation2 + $0x110] sm:$0xff]
          %v1084 = vld [vmem:[#allocation2 + $0x118] sm:$0xff]
          %v1085 = vld [vmem:[#allocation2 + $0x120] sm:$0xff]
          %v1086 = vld [vmem:[#allocation2 + $0x128] sm:$0xff]
          %v1087 = vld [vmem:[#allocation2 + $0x130] sm:$0xff]
          %v1088 = vld [vmem:[#allocation2 + $0x138] sm:$0xff]
          %v1089 = vld [vmem:[#allocation2 + $0x140] sm:$0xff]
          %v1090 = vld [vmem:[#allocation2 + $0x148] sm:$0xff]
          %v1091 = vld [vmem:[#allocation2 + $0x150] sm:$0xff]
          %v1092 = vld [vmem:[#allocation2 + $0x158] sm:$0xff]
          %v1093 = vld [vmem:[#allocation2 + $0x160] sm:$0xff]
          %v1094 = vld [vmem:[#allocation2 + $0x168] sm:$0xff]
          %v1095 = vld [vmem:[#allocation2 + $0x170] sm:$0xff]
          %v1096 = vld [vmem:[#allocation2 + $0x178] sm:$0xff]
          %v1097 = vld [vmem:[#allocation2 + $0x180] sm:$0xff]
          %v1098 = vld [vmem:[#allocation2 + $0x188] sm:$0xff]
          %v1099 = vld [vmem:[#allocation2 + $0x190] sm:$0xff]
          %v1100 = vld [vmem:[#allocation2 + $0x198] sm:$0xff]
          %v1101 = vld [vmem:[#allocation2 + $0x1a0] sm:$0xff]
          %v1102 = vld [vmem:[#allocation2 + $0x1a8] sm:$0xff]
          %v1103 = vld [vmem:[#allocation2 + $0x1b0] sm:$0xff]
          %v1104 = vld [vmem:[#allocation2 + $0x1b8] sm:$0xff]
          %v1105 = vld [vmem:[#allocation2 + $0x1c0] sm:$0xff]
          %v1106 = vld [vmem:[#allocation2 + $0x1c8] sm:$0xff]
          %v1107 = vld [vmem:[#allocation2 + $0x1d0] sm:$0xff]
          %v1108 = vld [vmem:[#allocation2 + $0x1d8] sm:$0xff]
          %v1109 = vld [vmem:[#allocation2 + $0x1e0] sm:$0xff]
          %v1110 = vld [vmem:[#allocation2 + $0x1e8] sm:$0xff]
          %v1111 = vld [vmem:[#allocation2 + $0x1f0] sm:$0xff]
          %v1112 = vld [vmem:[#allocation2 + $0x1f8] sm:$0xff]
          %v1113 = vld [vmem:[%s265] sm:$0x1]
          %v1115 = vperm.slane %v1113, 0
          %v1117 = vadd.f32 %v1049, %v1115
          %v1118 = vadd.f32 %v1050, %v1115
          %v1119 = vadd.f32 %v1051, %v1115
          %v1120 = vadd.f32 %v1052, %v1115
          %v1121 = vadd.f32 %v1053, %v1115
          %v1122 = vadd.f32 %v1054, %v1115
          %v1123 = vadd.f32 %v1055, %v1115
          %v1124 = vadd.f32 %v1056, %v1115
          %v1125 = vadd.f32 %v1057, %v1115
          %v1126 = vadd.f32 %v1058, %v1115
          %v1127 = vadd.f32 %v1059, %v1115
          %v1128 = vadd.f32 %v1060, %v1115
          %v1129 = vadd.f32 %v1061, %v1115
          %v1130 = vadd.f32 %v1062, %v1115
          %v1131 = vadd.f32 %v1063, %v1115
          %v1132 = vadd.f32 %v1064, %v1115
          %v1133 = vadd.f32 %v1065, %v1115
          %v1134 = vadd.f32 %v1066, %v1115
          %v1135 = vadd.f32 %v1067, %v1115
          %v1136 = vadd.f32 %v1068, %v1115
          %v1137 = vadd.f32 %v1069, %v1115
          %v1138 = vadd.f32 %v1070, %v1115
          %v1139 = vadd.f32 %v1071, %v1115
          %v1140 = vadd.f32 %v1072, %v1115
          %v1141 = vadd.f32 %v1073, %v1115
          %v1142 = vadd.f32 %v1074, %v1115
          %v1143 = vadd.f32 %v1075, %v1115
          %v1144 = vadd.f32 %v1076, %v1115
          %v1145 = vadd.f32 %v1077, %v1115
          %v1146 = vadd.f32 %v1078, %v1115
          %v1147 = vadd.f32 %v1079, %v1115
          %v1148 = vadd.f32 %v1080, %v1115
          %v1149 = vadd.f32 %v1081, %v1115
          %v1150 = vadd.f32 %v1082, %v1115
          %v1151 = vadd.f32 %v1083, %v1115
          %v1152 = vadd.f32 %v1084, %v1115
          %v1153 = vadd.f32 %v1085, %v1115
          %v1154 = vadd.f32 %v1086, %v1115
          %v1155 = vadd.f32 %v1087, %v1115
          %v1156 = vadd.f32 %v1088, %v1115
          %v1157 = vadd.f32 %v1089, %v1115
          %v1158 = vadd.f32 %v1090, %v1115
          %v1159 = vadd.f32 %v1091, %v1115
          %v1160 = vadd.f32 %v1092, %v1115
          %v1161 = vadd.f32 %v1093, %v1115
          %v1162 = vadd.f32 %v1094, %v1115
          %v1163 = vadd.f32 %v1095, %v1115
          %v1164 = vadd.f32 %v1096, %v1115
          %v1165 = vadd.f32 %v1097, %v1115
          %v1166 = vadd.f32 %v1098, %v1115
          %v1167 = vadd.f32 %v1099, %v1115
          %v1168 = vadd.f32 %v1100, %v1115
          %v1169 = vadd.f32 %v1101, %v1115
          %v1170 = vadd.f32 %v1102, %v1115
          %v1171 = vadd.f32 %v1103, %v1115
          %v1172 = vadd.f32 %v1104, %v1115
          %v1173 = vadd.f32 %v1105, %v1115
          %v1174 = vadd.f32 %v1106, %v1115
          %v1175 = vadd.f32 %v1107, %v1115
          %v1176 = vadd.f32 %v1108, %v1115
          %v1177 = vadd.f32 %v1109, %v1115
          %v1178 = vadd.f32 %v1110, %v1115
          %v1179 = vadd.f32 %v1111, %v1115
          %v1180 = vadd.f32 %v1112, %v1115
          %v1181 = vmax.f32 %v1117, 0.0
          %v1182 = vmax.f32 %v1118, 0.0
          %v1183 = vmax.f32 %v1119, 0.0
          %v1184 = vmax.f32 %v1120, 0.0
          %v1185 = vmax.f32 %v1121, 0.0
          %v1186 = vmax.f32 %v1122, 0.0
          %v1187 = vmax.f32 %v1123, 0.0
          %v1188 = vmax.f32 %v1124, 0.0
          %v1189 = vmax.f32 %v1125, 0.0
          %v1190 = vmax.f32 %v1126, 0.0
          %v1191 = vmax.f32 %v1127, 0.0
          %v1192 = vmax.f32 %v1128, 0.0
          %v1193 = vmax.f32 %v1129, 0.0
          %v1194 = vmax.f32 %v1130, 0.0
          %v1195 = vmax.f32 %v1131, 0.0
          %v1196 = vmax.f32 %v1132, 0.0
          %v1197 = vmax.f32 %v1133, 0.0
          %v1198 = vmax.f32 %v1134, 0.0
          %v1199 = vmax.f32 %v1135, 0.0
          %v1200 = vmax.f32 %v1136, 0.0
          %v1201 = vmax.f32 %v1137, 0.0
          %v1202 = vmax.f32 %v1138, 0.0
          %v1203 = vmax.f32 %v1139, 0.0
          %v1204 = vmax.f32 %v1140, 0.0
          %v1205 = vmax.f32 %v1141, 0.0
          %v1206 = vmax.f32 %v1142, 0.0
          %v1207 = vmax.f32 %v1143, 0.0
          %v1208 = vmax.f32 %v1144, 0.0
          %v1209 = vmax.f32 %v1145, 0.0
          %v1210 = vmax.f32 %v1146, 0.0
          %v1211 = vmax.f32 %v1147, 0.0
          %v1212 = vmax.f32 %v1148, 0.0
          %v1213 = vmax.f32 %v1149, 0.0
          %v1214 = vmax.f32 %v1150, 0.0
          %v1215 = vmax.f32 %v1151, 0.0
          %v1216 = vmax.f32 %v1152, 0.0
          %v1217 = vmax.f32 %v1153, 0.0
          %v1218 = vmax.f32 %v1154, 0.0
          %v1219 = vmax.f32 %v1155, 0.0
          %v1220 = vmax.f32 %v1156, 0.0
          %v1221 = vmax.f32 %v1157, 0.0
          %v1222 = vmax.f32 %v1158, 0.0
          %v1223 = vmax.f32 %v1159, 0.0
          %v1224 = vmax.f32 %v1160, 0.0
          %v1225 = vmax.f32 %v1161, 0.0
          %v1226 = vmax.f32 %v1162, 0.0
          %v1227 = vmax.f32 %v1163, 0.0
          %v1228 = vmax.f32 %v1164, 0.0
          %v1229 = vmax.f32 %v1165, 0.0
          %v1230 = vmax.f32 %v1166, 0.0
          %v1231 = vmax.f32 %v1167, 0.0
          %v1232 = vmax.f32 %v1168, 0.0
          %v1233 = vmax.f32 %v1169, 0.0
          %v1234 = vmax.f32 %v1170, 0.0
          %v1235 = vmax.f32 %v1171, 0.0
          %v1236 = vmax.f32 %v1172, 0.0
          %v1237 = vmax.f32 %v1173, 0.0
          %v1238 = vmax.f32 %v1174, 0.0
          %v1239 = vmax.f32 %v1175, 0.0
          %v1240 = vmax.f32 %v1176, 0.0
          %v1241 = vmax.f32 %v1177, 0.0
          %v1242 = vmax.f32 %v1178, 0.0
          %v1243 = vmax.f32 %v1179, 0.0
          %v1244 = vmax.f32 %v1180, 0.0
          %1245 = vst.msk [vmem:[%s236] sm:$0xff] %vm981, %v1181
          %1246 = vst.msk [vmem:[%s236 + $0x8] sm:$0xff] %vm981, %v1182
          %1247 = vst.msk [vmem:[%s236 + $0x10] sm:$0xff] %vm981, %v1183
          %1248 = vst.msk [vmem:[%s236 + $0x18] sm:$0xff] %vm981, %v1184
          %1249 = vst.msk [vmem:[%s236 + $0x20] sm:$0xff] %vm981, %v1185
          %1250 = vst.msk [vmem:[%s236 + $0x28] sm:$0xff] %vm981, %v1186
          %1251 = vst.msk [vmem:[%s236 + $0x30] sm:$0xff] %vm981, %v1187
          %1252 = vst.msk [vmem:[%s236 + $0x38] sm:$0xff] %vm981, %v1188
          %1253 = vst.msk [vmem:[%s236 + $0x40] sm:$0xff] %vm981, %v1189
          %1254 = vst.msk [vmem:[%s236 + $0x48] sm:$0xff] %vm981, %v1190
          %1255 = vst.msk [vmem:[%s236 + $0x50] sm:$0xff] %vm981, %v1191
          %1256 = vst.msk [vmem:[%s236 + $0x58] sm:$0xff] %vm981, %v1192
          %1257 = vst.msk [vmem:[%s236 + $0x60] sm:$0xff] %vm981, %v1193
          %1258 = vst.msk [vmem:[%s236 + $0x68] sm:$0xff] %vm981, %v1194
          %1259 = vst.msk [vmem:[%s236 + $0x70] sm:$0xff] %vm981, %v1195
          %1260 = vst.msk [vmem:[%s236 + $0x78] sm:$0xff] %vm981, %v1196
          %1261 = vst.msk [vmem:[%s236 + $0x80] sm:$0xff] %vm981, %v1197
          %1262 = vst.msk [vmem:[%s236 + $0x88] sm:$0xff] %vm981, %v1198
          %1263 = vst.msk [vmem:[%s236 + $0x90] sm:$0xff] %vm981, %v1199
          %1264 = vst.msk [vmem:[%s236 + $0x98] sm:$0xff] %vm981, %v1200
          %1265 = vst.msk [vmem:[%s236 + $0xa0] sm:$0xff] %vm981, %v1201
          %1266 = vst.msk [vmem:[%s236 + $0xa8] sm:$0xff] %vm981, %v1202
          %1267 = vst.msk [vmem:[%s236 + $0xb0] sm:$0xff] %vm981, %v1203
          %1268 = vst.msk [vmem:[%s236 + $0xb8] sm:$0xff] %vm981, %v1204
          %1269 = vst.msk [vmem:[%s236 + $0xc0] sm:$0xff] %vm981, %v1205
          %1270 = vst.msk [vmem:[%s236 + $0xc8] sm:$0xff] %vm981, %v1206
          %1271 = vst.msk [vmem:[%s236 + $0xd0] sm:$0xff] %vm981, %v1207
          %1272 = vst.msk [vmem:[%s236 + $0xd8] sm:$0xff] %vm981, %v1208
          %1273 = vst.msk [vmem:[%s236 + $0xe0] sm:$0xff] %vm981, %v1209
          %1274 = vst.msk [vmem:[%s236 + $0xe8] sm:$0xff] %vm981, %v1210
          %1275 = vst.msk [vmem:[%s236 + $0xf0] sm:$0xff] %vm981, %v1211
          %1276 = vst.msk [vmem:[%s236 + $0xf8] sm:$0xff] %vm981, %v1212
          %1277 = vst.msk [vmem:[%s236 + $0x100] sm:$0xff] %vm981, %v1213
          %1278 = vst.msk [vmem:[%s236 + $0x108] sm:$0xff] %vm981, %v1214
          %1279 = vst.msk [vmem:[%s236 + $0x110] sm:$0xff] %vm981, %v1215
          %1280 = vst.msk [vmem:[%s236 + $0x118] sm:$0xff] %vm981, %v1216
          %1281 = vst.msk [vmem:[%s236 + $0x120] sm:$0xff] %vm981, %v1217
          %1282 = vst.msk [vmem:[%s236 + $0x128] sm:$0xff] %vm981, %v1218
          %1283 = vst.msk [vmem:[%s236 + $0x130] sm:$0xff] %vm981, %v1219
          %1284 = vst.msk [vmem:[%s236 + $0x138] sm:$0xff] %vm981, %v1220
          %1285 = vst.msk [vmem:[%s236 + $0x140] sm:$0xff] %vm981, %v1221
          %1286 = vst.msk [vmem:[%s236 + $0x148] sm:$0xff] %vm981, %v1222
          %1287 = vst.msk [vmem:[%s236 + $0x150] sm:$0xff] %vm981, %v1223
          %1288 = vst.msk [vmem:[%s236 + $0x158] sm:$0xff] %vm981, %v1224
          %1289 = vst.msk [vmem:[%s236 + $0x160] sm:$0xff] %vm981, %v1225
          %1290 = vst.msk [vmem:[%s236 + $0x168] sm:$0xff] %vm981, %v1226
          %1291 = vst.msk [vmem:[%s236 + $0x170] sm:$0xff] %vm981, %v1227
          %1292 = vst.msk [vmem:[%s236 + $0x178] sm:$0xff] %vm981, %v1228
          %1293 = vst.msk [vmem:[%s236 + $0x180] sm:$0xff] %vm981, %v1229
          %1294 = vst.msk [vmem:[%s236 + $0x188] sm:$0xff] %vm981, %v1230
          %1295 = vst.msk [vmem:[%s236 + $0x190] sm:$0xff] %vm981, %v1231
          %1296 = vst.msk [vmem:[%s236 + $0x198] sm:$0xff] %vm981, %v1232
          %1297 = vst.msk [vmem:[%s236 + $0x1a0] sm:$0xff] %vm981, %v1233
          %1298 = vst.msk [vmem:[%s236 + $0x1a8] sm:$0xff] %vm981, %v1234
          %1299 = vst.msk [vmem:[%s236 + $0x1b0] sm:$0xff] %vm981, %v1235
          %1300 = vst.msk [vmem:[%s236 + $0x1b8] sm:$0xff] %vm981, %v1236
          %1301 = vst.msk [vmem:[%s236 + $0x1c0] sm:$0xff] %vm981, %v1237
          %1302 = vst.msk [vmem:[%s236 + $0x1c8] sm:$0xff] %vm981, %v1238
          %1303 = vst.msk [vmem:[%s236 + $0x1d0] sm:$0xff] %vm981, %v1239
          %1304 = vst.msk [vmem:[%s236 + $0x1d8] sm:$0xff] %vm981, %v1240
          %1305 = vst.msk [vmem:[%s236 + $0x1e0] sm:$0xff] %vm981, %v1241
          %1306 = vst.msk [vmem:[%s236 + $0x1e8] sm:$0xff] %vm981, %v1242
          %1307 = vst.msk [vmem:[%s236 + $0x1f0] sm:$0xff] %vm981, %v1243
          %1308 = vst.msk [vmem:[%s236 + $0x1f8] sm:$0xff] %vm981, %v1244
        $region40: #{tpu_custom_call.1} parent=31 // pred_fallthru
          _
        %s1309 = sand.u32 %s125, 1
        %s1310 = sand.u32 %s125, 1
        %s1311 = smul.addr %s1310, 512
        %s1312 = scalar_lea.vmem [#allocation3], %s1311
        // Predicated region
        $region41: #{tpu_custom_call.1} parent=31 // pred_check
          %p1313 = pneg %p135
        $region42: #{tpu_custom_call.1} parent=31 // pred_check_branch
          %1315 = sbr.rel (%p1313) target = $region44
        $region43: #{tpu_custom_call.1} parent=31 // pred_region
          %s1316 = smul.u32 64, %s19
          %s1317 = ssub.s32 4705, %s1316
          %p1318 = scmp.lt.s32.totalorder %s1317, 64
          %s1319 = scalar_select %p1318, %s1317, 64
          %s1320 = smul.u32 8, %s1319
          %p1321 = scmp.ne.s32.totalorder 0, %s1320
          %s1322 = sadd.s32 %s20, %s1316
          %s1323 = smul.addr %s1322, 8
          %s1324 = scalar_lea.vmem %s3, %s1323
          // Predicated region
          $region45: #{tpu_custom_call.1} parent=43 // pred_check
            %p1325 = pneg %p1321
          $region46: #{tpu_custom_call.1} parent=43 // pred_check_branch
            %1327 = sbr.rel (%p1325) target = $region48
          $region47: #{tpu_custom_call.1} parent=43 // pred_region
            // Predicated region
            $region49: #{tpu_custom_call.1} parent=47 // pred_check
              _
            $region50: #{tpu_custom_call.1} parent=47 // pred_check_branch
              %1329 = sbr.rel (0) target = $region52
            $region51: #{tpu_custom_call.1} parent=47 // pred_region
              // Predicated region
              $region71: #{tpu_custom_call.1} parent=51 // pred_check
                _
              $region72: #{tpu_custom_call.1} parent=51 // pred_check_branch
                %1441 = sbr.rel (0) target = $region74
              $region73: #{tpu_custom_call.1} parent=51 // pred_region
                %s1442 = sshrl.u32 %s1319, 5
                // While loop
                $region75: #{tpu_custom_call.1} parent=73 // loop_pre_header
                  _
                $region76: #{tpu_custom_call.1} parent=73 // loop_header
                  %s1444 = sphi 0, %s1446
                  %p1445 = scmp.ge.s32.totalorder %s1444, %s1442
                  %s1449 = sphi 0, %s1518
                  %s1450 = sphi %s1312, %s1521
                  %s1451 = sphi %s1324, %s1522
                $region77: #{tpu_custom_call.1} parent=73 // loop_header_branch
                  %1448 = sbr.rel (%p1445) target = $region81
                $region78: #{tpu_custom_call.1} parent=73 // loop_body
                  %v1452 = vld [vmem:[%s1450] sm:$0xff]
                  %1453 = vst [vmem:[%s1451] sm:$0xff] %v1452
                  %v1454 = vld [vmem:[%s1450 + $0x8] sm:$0xff]
                  %1455 = vst [vmem:[%s1451 + $0x8] sm:$0xff] %v1454
                  %v1456 = vld [vmem:[%s1450 + $0x10] sm:$0xff]
                  %1457 = vst [vmem:[%s1451 + $0x10] sm:$0xff] %v1456
                  %v1458 = vld [vmem:[%s1450 + $0x18] sm:$0xff]
                  %1459 = vst [vmem:[%s1451 + $0x18] sm:$0xff] %v1458
                  %v1460 = vld [vmem:[%s1450 + $0x20] sm:$0xff]
                  %1461 = vst [vmem:[%s1451 + $0x20] sm:$0xff] %v1460
                  %v1462 = vld [vmem:[%s1450 + $0x28] sm:$0xff]
                  %1463 = vst [vmem:[%s1451 + $0x28] sm:$0xff] %v1462
                  %v1464 = vld [vmem:[%s1450 + $0x30] sm:$0xff]
                  %1465 = vst [vmem:[%s1451 + $0x30] sm:$0xff] %v1464
                  %v1466 = vld [vmem:[%s1450 + $0x38] sm:$0xff]
                  %1467 = vst [vmem:[%s1451 + $0x38] sm:$0xff] %v1466
                  %v1468 = vld [vmem:[%s1450 + $0x40] sm:$0xff]
                  %1469 = vst [vmem:[%s1451 + $0x40] sm:$0xff] %v1468
                  %v1470 = vld [vmem:[%s1450 + $0x48] sm:$0xff]
                  %1471 = vst [vmem:[%s1451 + $0x48] sm:$0xff] %v1470
                  %v1472 = vld [vmem:[%s1450 + $0x50] sm:$0xff]
                  %1473 = vst [vmem:[%s1451 + $0x50] sm:$0xff] %v1472
                  %v1474 = vld [vmem:[%s1450 + $0x58] sm:$0xff]
                  %1475 = vst [vmem:[%s1451 + $0x58] sm:$0xff] %v1474
                  %v1476 = vld [vmem:[%s1450 + $0x60] sm:$0xff]
                  %1477 = vst [vmem:[%s1451 + $0x60] sm:$0xff] %v1476
                  %v1478 = vld [vmem:[%s1450 + $0x68] sm:$0xff]
                  %1479 = vst [vmem:[%s1451 + $0x68] sm:$0xff] %v1478
                  %v1480 = vld [vmem:[%s1450 + $0x70] sm:$0xff]
                  %1481 = vst [vmem:[%s1451 + $0x70] sm:$0xff] %v1480
                  %v1482 = vld [vmem:[%s1450 + $0x78] sm:$0xff]
                  %1483 = vst [vmem:[%s1451 + $0x78] sm:$0xff] %v1482
                  %v1484 = vld [vmem:[%s1450 + $0x80] sm:$0xff]
                  %1485 = vst [vmem:[%s1451 + $0x80] sm:$0xff] %v1484
                  %v1486 = vld [vmem:[%s1450 + $0x88] sm:$0xff]
                  %1487 = vst [vmem:[%s1451 + $0x88] sm:$0xff] %v1486
                  %v1488 = vld [vmem:[%s1450 + $0x90] sm:$0xff]
                  %1489 = vst [vmem:[%s1451 + $0x90] sm:$0xff] %v1488
                  %v1490 = vld [vmem:[%s1450 + $0x98] sm:$0xff]
                  %1491 = vst [vmem:[%s1451 + $0x98] sm:$0xff] %v1490
                  %v1492 = vld [vmem:[%s1450 + $0xa0] sm:$0xff]
                  %1493 = vst [vmem:[%s1451 + $0xa0] sm:$0xff] %v1492
                  %v1494 = vld [vmem:[%s1450 + $0xa8] sm:$0xff]
                  %1495 = vst [vmem:[%s1451 + $0xa8] sm:$0xff] %v1494
                  %v1496 = vld [vmem:[%s1450 + $0xb0] sm:$0xff]
                  %1497 = vst [vmem:[%s1451 + $0xb0] sm:$0xff] %v1496
                  %v1498 = vld [vmem:[%s1450 + $0xb8] sm:$0xff]
                  %1499 = vst [vmem:[%s1451 + $0xb8] sm:$0xff] %v1498
                  %v1500 = vld [vmem:[%s1450 + $0xc0] sm:$0xff]
                  %1501 = vst [vmem:[%s1451 + $0xc0] sm:$0xff] %v1500
                  %v1502 = vld [vmem:[%s1450 + $0xc8] sm:$0xff]
                  %1503 = vst [vmem:[%s1451 + $0xc8] sm:$0xff] %v1502
                  %v1504 = vld [vmem:[%s1450 + $0xd0] sm:$0xff]
                  %1505 = vst [vmem:[%s1451 + $0xd0] sm:$0xff] %v1504
                  %v1506 = vld [vmem:[%s1450 + $0xd8] sm:$0xff]
                  %1507 = vst [vmem:[%s1451 + $0xd8] sm:$0xff] %v1506
                  %v1508 = vld [vmem:[%s1450 + $0xe0] sm:$0xff]
                  %1509 = vst [vmem:[%s1451 + $0xe0] sm:$0xff] %v1508
                  %v1510 = vld [vmem:[%s1450 + $0xe8] sm:$0xff]
                  %1511 = vst [vmem:[%s1451 + $0xe8] sm:$0xff] %v1510
                  %v1512 = vld [vmem:[%s1450 + $0xf0] sm:$0xff]
                  %1513 = vst [vmem:[%s1451 + $0xf0] sm:$0xff] %v1512
                  %v1514 = vld [vmem:[%s1450 + $0xf8] sm:$0xff]
                  %1515 = vst [vmem:[%s1451 + $0xf8] sm:$0xff] %v1514
                  %s1516 = sadd.s32 1, %s1449
                  %p1517 = scmp.ge.s32.totalorder %s1516, %s1442
                  %s1518 = scalar_select %p1517, 0, %s1516
                  %s1519 = smul.u32 %s1518, 256
                  %s1520 = smul.u32 %s1518, 256
                  %s1521 = scalar_lea.vmem %s1312, %s1519 [#allocation3]
                  %s1522 = scalar_lea.vmem %s1324, %s1520
                $region79: #{tpu_custom_call.1} parent=73 // loop_footer
                  %s1446 = sadd.s32 %s1444, 1
                $region80: #{tpu_custom_call.1} parent=73 // loop_footer_branch
                  %1443 = sbr.rel target = $region76
                $region81: #{tpu_custom_call.1} parent=73 // loop_exit
                  _
                %s1523 = sshrl.u32 %s1319, 5
                %s1524 = sand.u32 %s1319, 31
                %s1525 = smul.u32 %s1523, 32
                %s1526 = smul.u32 8, %s1525
                %s1527 = scalar_lea.vmem %s1312, %s1526 [#allocation3]
                %s1528 = smul.u32 8, %s1525
                %s1529 = scalar_lea.vmem %s1324, %s1528
                // While loop
                $region82: #{tpu_custom_call.1} parent=73 // loop_pre_header
                  _
                $region83: #{tpu_custom_call.1} parent=73 // loop_header
                  %s1531 = sphi 0, %s1533
                  %p1532 = scmp.ge.s32.totalorder %s1531, %s1524
                  %s1536 = sphi 0, %s1543
                  %s1537 = sphi %s1527, %s1546
                  %s1538 = sphi %s1529, %s1547
                $region84: #{tpu_custom_call.1} parent=73 // loop_header_branch
                  %1535 = sbr.rel (%p1532) target = $region88
                $region85: #{tpu_custom_call.1} parent=73 // loop_body
                  %v1539 = vld [vmem:[%s1537] sm:$0xff]
                  %1540 = vst [vmem:[%s1538] sm:$0xff] %v1539
                  %s1541 = sadd.s32 1, %s1536
                  %p1542 = scmp.ge.s32.totalorder %s1541, %s1524
                  %s1543 = scalar_select %p1542, 0, %s1541
                  %s1544 = smul.u32 %s1543, 8
                  %s1545 = smul.u32 %s1543, 8
                  %s1546 = scalar_lea.vmem %s1527, %s1544 [#allocation3]
                  %s1547 = scalar_lea.vmem %s1529, %s1545
                $region86: #{tpu_custom_call.1} parent=73 // loop_footer
                  %s1533 = sadd.s32 %s1531, 1
                $region87: #{tpu_custom_call.1} parent=73 // loop_footer_branch
                  %1530 = sbr.rel target = $region83
                $region88: #{tpu_custom_call.1} parent=73 // loop_exit
                  _
              $region74: #{tpu_custom_call.1} parent=51 // pred_fallthru
                _
              // Predicated region
              $region89: #{tpu_custom_call.1} parent=51 // pred_check
                _
              $region90: #{tpu_custom_call.1} parent=51 // pred_check_branch
                %1549 = sbr.rel target = $region92
              $region91: #{tpu_custom_call.1} parent=51 // pred_region
                _
              $region92: #{tpu_custom_call.1} parent=51 // pred_fallthru
                _
            $region52: #{tpu_custom_call.1} parent=47 // pred_fallthru
              _
            // Predicated region
            $region53: #{tpu_custom_call.1} parent=47 // pred_check
              _
            $region54: #{tpu_custom_call.1} parent=47 // pred_check_branch
              %1331 = sbr.rel target = $region56
            $region55: #{tpu_custom_call.1} parent=47 // pred_region
              %s1333 = ssub.s32 256, 1
              %s1334 = sshrl.u32 %s1319, 5
              // While loop
              $region57: #{tpu_custom_call.1} parent=55 // loop_pre_header
                _
              $region58: #{tpu_custom_call.1} parent=55 // loop_header
                %s1336 = sphi 0, %s1338
                %p1337 = scmp.ge.s32.totalorder %s1336, %s1334
                %s1341 = sphi 0, %s1410
                %s1342 = sphi %s1312, %s1413
                %s1343 = sphi %s1324, %s1414
              $region59: #{tpu_custom_call.1} parent=55 // loop_header_branch
                %1340 = sbr.rel (%p1337) target = $region63
              $region60: #{tpu_custom_call.1} parent=55 // loop_body
                %v1344 = vld [vmem:[%s1342] sm:%s1333]
                %1345 = vst [vmem:[%s1343] sm:%s1333] %v1344
                %v1346 = vld [vmem:[%s1342 + $0x8] sm:%s1333]
                %1347 = vst [vmem:[%s1343 + $0x8] sm:%s1333] %v1346
                %v1348 = vld [vmem:[%s1342 + $0x10] sm:%s1333]
                %1349 = vst [vmem:[%s1343 + $0x10] sm:%s1333] %v1348
                %v1350 = vld [vmem:[%s1342 + $0x18] sm:%s1333]
                %1351 = vst [vmem:[%s1343 + $0x18] sm:%s1333] %v1350
                %v1352 = vld [vmem:[%s1342 + $0x20] sm:%s1333]
                %1353 = vst [vmem:[%s1343 + $0x20] sm:%s1333] %v1352
                %v1354 = vld [vmem:[%s1342 + $0x28] sm:%s1333]
                %1355 = vst [vmem:[%s1343 + $0x28] sm:%s1333] %v1354
                %v1356 = vld [vmem:[%s1342 + $0x30] sm:%s1333]
                %1357 = vst [vmem:[%s1343 + $0x30] sm:%s1333] %v1356
                %v1358 = vld [vmem:[%s1342 + $0x38] sm:%s1333]
                %1359 = vst [vmem:[%s1343 + $0x38] sm:%s1333] %v1358
                %v1360 = vld [vmem:[%s1342 + $0x40] sm:%s1333]
                %1361 = vst [vmem:[%s1343 + $0x40] sm:%s1333] %v1360
                %v1362 = vld [vmem:[%s1342 + $0x48] sm:%s1333]
                %1363 = vst [vmem:[%s1343 + $0x48] sm:%s1333] %v1362
                %v1364 = vld [vmem:[%s1342 + $0x50] sm:%s1333]
                %1365 = vst [vmem:[%s1343 + $0x50] sm:%s1333] %v1364
                %v1366 = vld [vmem:[%s1342 + $0x58] sm:%s1333]
                %1367 = vst [vmem:[%s1343 + $0x58] sm:%s1333] %v1366
                %v1368 = vld [vmem:[%s1342 + $0x60] sm:%s1333]
                %1369 = vst [vmem:[%s1343 + $0x60] sm:%s1333] %v1368
                %v1370 = vld [vmem:[%s1342 + $0x68] sm:%s1333]
                %1371 = vst [vmem:[%s1343 + $0x68] sm:%s1333] %v1370
                %v1372 = vld [vmem:[%s1342 + $0x70] sm:%s1333]
                %1373 = vst [vmem:[%s1343 + $0x70] sm:%s1333] %v1372
                %v1374 = vld [vmem:[%s1342 + $0x78] sm:%s1333]
                %1375 = vst [vmem:[%s1343 + $0x78] sm:%s1333] %v1374
                %v1376 = vld [vmem:[%s1342 + $0x80] sm:%s1333]
                %1377 = vst [vmem:[%s1343 + $0x80] sm:%s1333] %v1376
                %v1378 = vld [vmem:[%s1342 + $0x88] sm:%s1333]
                %1379 = vst [vmem:[%s1343 + $0x88] sm:%s1333] %v1378
                %v1380 = vld [vmem:[%s1342 + $0x90] sm:%s1333]
                %1381 = vst [vmem:[%s1343 + $0x90] sm:%s1333] %v1380
                %v1382 = vld [vmem:[%s1342 + $0x98] sm:%s1333]
                %1383 = vst [vmem:[%s1343 + $0x98] sm:%s1333] %v1382
                %v1384 = vld [vmem:[%s1342 + $0xa0] sm:%s1333]
                %1385 = vst [vmem:[%s1343 + $0xa0] sm:%s1333] %v1384
                %v1386 = vld [vmem:[%s1342 + $0xa8] sm:%s1333]
                %1387 = vst [vmem:[%s1343 + $0xa8] sm:%s1333] %v1386
                %v1388 = vld [vmem:[%s1342 + $0xb0] sm:%s1333]
                %1389 = vst [vmem:[%s1343 + $0xb0] sm:%s1333] %v1388
                %v1390 = vld [vmem:[%s1342 + $0xb8] sm:%s1333]
                %1391 = vst [vmem:[%s1343 + $0xb8] sm:%s1333] %v1390
                %v1392 = vld [vmem:[%s1342 + $0xc0] sm:%s1333]
                %1393 = vst [vmem:[%s1343 + $0xc0] sm:%s1333] %v1392
                %v1394 = vld [vmem:[%s1342 + $0xc8] sm:%s1333]
                %1395 = vst [vmem:[%s1343 + $0xc8] sm:%s1333] %v1394
                %v1396 = vld [vmem:[%s1342 + $0xd0] sm:%s1333]
                %1397 = vst [vmem:[%s1343 + $0xd0] sm:%s1333] %v1396
                %v1398 = vld [vmem:[%s1342 + $0xd8] sm:%s1333]
                %1399 = vst [vmem:[%s1343 + $0xd8] sm:%s1333] %v1398
                %v1400 = vld [vmem:[%s1342 + $0xe0] sm:%s1333]
                %1401 = vst [vmem:[%s1343 + $0xe0] sm:%s1333] %v1400
                %v1402 = vld [vmem:[%s1342 + $0xe8] sm:%s1333]
                %1403 = vst [vmem:[%s1343 + $0xe8] sm:%s1333] %v1402
                %v1404 = vld [vmem:[%s1342 + $0xf0] sm:%s1333]
                %1405 = vst [vmem:[%s1343 + $0xf0] sm:%s1333] %v1404
                %v1406 = vld [vmem:[%s1342 + $0xf8] sm:%s1333]
                %1407 = vst [vmem:[%s1343 + $0xf8] sm:%s1333] %v1406
                %s1408 = sadd.s32 1, %s1341
                %p1409 = scmp.ge.s32.totalorder %s1408, %s1334
                %s1410 = scalar_select %p1409, 0, %s1408
                %s1411 = smul.u32 %s1410, 256
                %s1412 = smul.u32 %s1410, 256
                %s1413 = scalar_lea.vmem %s1312, %s1411 [#allocation3]
                %s1414 = scalar_lea.vmem %s1324, %s1412
              $region61: #{tpu_custom_call.1} parent=55 // loop_footer
                %s1338 = sadd.s32 %s1336, 1
              $region62: #{tpu_custom_call.1} parent=55 // loop_footer_branch
                %1335 = sbr.rel target = $region58
              $region63: #{tpu_custom_call.1} parent=55 // loop_exit
                _
              %s1415 = sshrl.u32 %s1319, 5
              %s1416 = sand.u32 %s1319, 31
              %s1417 = smul.u32 %s1415, 32
              %s1418 = smul.u32 8, %s1417
              %s1419 = scalar_lea.vmem %s1312, %s1418 [#allocation3]
              %s1420 = smul.u32 8, %s1417
              %s1421 = scalar_lea.vmem %s1324, %s1420
              // While loop
              $region64: #{tpu_custom_call.1} parent=55 // loop_pre_header
                _
              $region65: #{tpu_custom_call.1} parent=55 // loop_header
                %s1423 = sphi 0, %s1425
                %p1424 = scmp.ge.s32.totalorder %s1423, %s1416
                %s1428 = sphi 0, %s1435
                %s1429 = sphi %s1419, %s1438
                %s1430 = sphi %s1421, %s1439
              $region66: #{tpu_custom_call.1} parent=55 // loop_header_branch
                %1427 = sbr.rel (%p1424) target = $region70
              $region67: #{tpu_custom_call.1} parent=55 // loop_body
                %v1431 = vld [vmem:[%s1429] sm:%s1333]
                %1432 = vst [vmem:[%s1430] sm:%s1333] %v1431
                %s1433 = sadd.s32 1, %s1428
                %p1434 = scmp.ge.s32.totalorder %s1433, %s1416
                %s1435 = scalar_select %p1434, 0, %s1433
                %s1436 = smul.u32 %s1435, 8
                %s1437 = smul.u32 %s1435, 8
                %s1438 = scalar_lea.vmem %s1419, %s1436 [#allocation3]
                %s1439 = scalar_lea.vmem %s1421, %s1437
              $region68: #{tpu_custom_call.1} parent=55 // loop_footer
                %s1425 = sadd.s32 %s1423, 1
              $region69: #{tpu_custom_call.1} parent=55 // loop_footer_branch
                %1422 = sbr.rel target = $region65
              $region70: #{tpu_custom_call.1} parent=55 // loop_exit
                _
            $region56: #{tpu_custom_call.1} parent=47 // pred_fallthru
              _
          $region48: #{tpu_custom_call.1} parent=43 // pred_fallthru
            _
          %1550 = vnop
        $region44: #{tpu_custom_call.1} parent=31 // pred_fallthru
          _
      $region32: #{tpu_custom_call.1} parent=5 // pred_fallthru
        _
      %p1551 = scmp.le.s32.totalorder 2, %s9
      // Predicated region
      $region93: #{tpu_custom_call.1} parent=5 // pred_check
        %p1552 = pneg %p1551
      $region94: #{tpu_custom_call.1} parent=5 // pred_check_branch
        %1554 = sbr.rel (%p1552) target = $region96
      $region95: #{tpu_custom_call.1} parent=5 // pred_region
        %s1555 = ssub.s32 %s9, 2
        // Predicated region
        $region97: #{tpu_custom_call.1} parent=95 // pred_check
          %p1556 = pneg %p141
        $region98: #{tpu_custom_call.1} parent=95 // pred_check_branch
          %1558 = sbr.rel (%p1556) target = $region100
        $region99: #{tpu_custom_call.1} parent=95 // pred_region
          %s1559 = sand.u32 %s126, 1
          %s1560 = sand.u32 %s126, 1
          %s1561 = smul.addr %s1560, 512
          %s1562 = scalar_lea.vmem [#allocation3], %s1561
        $region100: #{tpu_custom_call.1} parent=95 // pred_fallthru
          _
      $region96: #{tpu_custom_call.1} parent=5 // pred_fallthru
        _
    $region6: #{tpu_custom_call.1} parent=1 // loop_footer
      %s13 = sadd.s32 1, %s9
    $region7: #{tpu_custom_call.1} parent=1 // loop_footer_branch
      %8 = sbr.rel target = $region3
    $region8: #{tpu_custom_call.1} parent=1 // loop_exit
      _

</llo_original>
